<compile_context>
chip_gen: v6e
topology: v6e:2x2x1
jax: 0.10.0
libtpu: 0.0.40
codegen_flags: <defaults>
</compile_context>

<pallas_src>
import jax
import jax.numpy as jnp
from jax.experimental import pallas as pl
from jax.experimental.pallas import tpu as pltpu

N_IN = 784        # fc1 input features (28*28)
N_H = 784         # fc1 output features
N_OUT = 10        # fc5 output features (real classes)
N_OUT_PAD = 128   # lane-aligned padded width for logits / probs


def _mlp2_kernel(x_ref, w1_ref, b1_ref, w5_ref, b5_ref, logits_ref, probs_ref):
    # fc1 + ReLU. bf16 MXU operands, f32 accumulation and f32 elementwise tail.
    x = x_ref[...].astype(jnp.bfloat16)                       # (TM, 784)
    h1 = jnp.dot(x, w1_ref[...], preferred_element_type=jnp.float32)
    h1 = jnp.maximum(h1 + b1_ref[...], 0.0)                   # (TM, 784) f32

    # TODO(synk): F.dropout(training=self.training) is identity in eval mode;
    # training-mode random dropout is intentionally not applied here.

    # fc5 + ReLU (output padded to 128 lanes; padded cols of w5/b5 are zero,
    # so padded logits are exactly 0 and get sliced away in the wrapper).
    z = jnp.dot(h1.astype(jnp.bfloat16), w5_ref[...],
                preferred_element_type=jnp.float32)
    z = jnp.maximum(z + b5_ref[...], 0.0)                     # (TM, 128) f32
    logits_ref[...] = z                                       # lane-dense store

    # Softmax over the 10 real classes; padded lanes masked to -inf -> prob 0.
    col = jax.lax.broadcasted_iota(jnp.int32, z.shape, 1)
    zm = jnp.where(col < N_OUT, z, -jnp.inf)
    m = jnp.max(zm, axis=1, keepdims=True)
    e = jnp.exp(zm - m)
    denom = jnp.sum(e, axis=1, keepdims=True)
    probs_ref[...] = e * pl.reciprocal(denom, approx=True)    # lane-dense store


def mlp2_forward(x, params, *, tm=512):
    """x: (B, 1, 28, 28) or (B, 784) float32.  Returns (relu(fc5(...)), softmax probs)."""
    # TODO(synk): the start_layer == 'feature' branch of the torch module is not
    # implemented; this is the default (start_layer=None) forward path.
    w1, b1, w5, b5 = params
    x2d = x.reshape(-1, N_IN).astype(jnp.float32)             # torch .view(-1, 784)
    B = x2d.shape[0]

    # Batch tile: multiple of 8 (sublane), capped at `tm`; pad B to whole tiles.
    tm = min(tm, max(8, ((B + 7) // 8) * 8))
    tm = ((tm + 7) // 8) * 8
    b_pad = ((B + tm - 1) // tm) * tm
    if b_pad != B:
        x2d = jnp.pad(x2d, ((0, b_pad - B), (0, 0)))

    # Resident bf16 matmul weights; f32 biases; fc5 zero-padded to 128 lanes.
    w1b = w1.astype(jnp.bfloat16)                                       # (784, 784)
    w5b = jnp.pad(w5, ((0, 0), (0, N_OUT_PAD - N_OUT))).astype(jnp.bfloat16)
    b1f = b1.reshape(1, N_H).astype(jnp.float32)
    b5f = jnp.pad(b5.reshape(1, N_OUT).astype(jnp.float32),
                  ((0, 0), (0, N_OUT_PAD - N_OUT)))

    grid = (b_pad // tm,)

    flops = 2 * b_pad * (N_IN * N_H + N_H * N_OUT_PAD)
    bytes_accessed = (x2d.size * 4 + w1b.size * 2 + w5b.size * 2
                      + b1f.size * 4 + b5f.size * 4
                      + 2 * b_pad * N_OUT_PAD * 4)
    cost = pl.CostEstimate(flops=flops,
                           transcendentals=b_pad * N_OUT_PAD,
                           bytes_accessed=bytes_accessed)

    logits_p, probs_p = pl.pallas_call(
        _mlp2_kernel,
        out_shape=(
            jax.ShapeDtypeStruct((b_pad, N_OUT_PAD), jnp.float32),
            jax.ShapeDtypeStruct((b_pad, N_OUT_PAD), jnp.float32),
        ),
        grid=grid,
        in_specs=[
            pl.BlockSpec((tm, N_IN), lambda i: (i, 0)),          # x tile (pipelined)
            pl.BlockSpec((N_IN, N_H), lambda i: (0, 0)),         # w1 (resident)
            pl.BlockSpec((1, N_H), lambda i: (0, 0)),            # b1 (resident)
            pl.BlockSpec((N_H, N_OUT_PAD), lambda i: (0, 0)),    # w5 (resident)
            pl.BlockSpec((1, N_OUT_PAD), lambda i: (0, 0)),      # b5 (resident)
        ],
        out_specs=(
            pl.BlockSpec((tm, N_OUT_PAD), lambda i: (i, 0)),
            pl.BlockSpec((tm, N_OUT_PAD), lambda i: (i, 0)),
        ),
        compiler_params=pltpu.CompilerParams(
            dimension_semantics=("parallel",),
            vmem_limit_bytes=32 * 1024 * 1024,
        ),
        cost_estimate=cost,
    )(x2d, w1b, b1f, w5b, b5f)

    # Strip batch padding and the padded output lanes.
    return logits_p[:B, :N_OUT], probs_p[:B, :N_OUT]


def init_params(key):
    """Deterministic init mirroring torch.nn.Linear (weights stored as (in, out))."""
    ks = jax.random.split(key, 4)

    def lin(kw, kb, fan_in, fan_out):
        bound = 1.0 / jnp.sqrt(fan_in)
        w = jax.random.uniform(kw, (fan_in, fan_out), jnp.float32, -bound, bound)
        b = jax.random.uniform(kb, (1, fan_out), jnp.float32, -bound, bound)
        return w, b

    w1, b1 = lin(ks[0], ks[1], N_IN, N_H)
    w5, b5 = lin(ks[2], ks[3], N_H, N_OUT)
    return (w1, b1, w5, b5)


if __name__ == "__main__":
    key = jax.random.PRNGKey(0)
    k_param, k_x = jax.random.split(key)
    params = init_params(k_param)

    # Small NCHW input consistent with x.view(-1, 784): (B, 1, 28, 28)
    x = jax.random.normal(k_x, (8, 1, 28, 28), dtype=jnp.float32)

    logits, probs = mlp2_forward(x, params)
    jax.block_until_ready((logits, probs))

    # Sanity check against a plain-JAX reference that uses the same bf16 matmul
    # operands with f32 accumulation (matches the kernel's numerics).
    w1, b1, w5, b5 = params
    x2d = x.reshape(-1, N_IN).astype(jnp.float32)
    h1 = jnp.maximum(
        jnp.dot(x2d.astype(jnp.bfloat16), w1.astype(jnp.bfloat16),
                preferred_element_type=jnp.float32) + b1, 0.0)
    z = jnp.maximum(
        jnp.dot(h1.astype(jnp.bfloat16), w5.astype(jnp.bfloat16),
                preferred_element_type=jnp.float32) + b5, 0.0)
    p = jax.nn.softmax(z, axis=1)

    assert logits.shape == (8, N_OUT) and probs.shape == (8, N_OUT)
    assert jnp.allclose(logits, z, atol=2e-3, rtol=2e-3)
    assert jnp.allclose(probs, p, atol=5e-3, rtol=5e-3)
    assert jnp.allclose(jnp.sum(probs, axis=1), 1.0, atol=5e-3)

    print("KERNEL_OK")
</pallas_src>

<mosaic_0001>
module attributes {stable_mosaic.version = 11 : i64} {
  func.func @_mlp2_kernel(%arg0: i32, %arg1: memref<8x784xf32, #tpu.memory_space<vmem>>, %arg2: memref<784x784xbf16, #tpu.memory_space<vmem>>, %arg3: memref<1x784xf32, #tpu.memory_space<vmem>>, %arg4: memref<784x128xbf16, #tpu.memory_space<vmem>>, %arg5: memref<1x128xf32, #tpu.memory_space<vmem>>, %arg6: memref<8x128xf32, #tpu.memory_space<vmem>>, %arg7: memref<8x128xf32, #tpu.memory_space<vmem>>) attributes {dimension_semantics = [#tpu.dimension_semantics<parallel>], iteration_bounds = array<i64: 1>, scalar_prefetch = 0 : i64, scratch_operands = 0 : i64, tpu.core_type = #tpu.core_type<tc>, window_params = [{transform_indices = @transform_0, window_bounds = array<i64: 8, 784>}, {pipeline_mode = #tpu.pipeline_mode<synchronous>, transform_indices = @transform_1, window_bounds = array<i64: 784, 784>}, {pipeline_mode = #tpu.pipeline_mode<synchronous>, transform_indices = @transform_2, window_bounds = array<i64: 1, 784>}, {pipeline_mode = #tpu.pipeline_mode<synchronous>, transform_indices = @transform_3, window_bounds = array<i64: 784, 128>}, {pipeline_mode = #tpu.pipeline_mode<synchronous>, transform_indices = @transform_4, window_bounds = array<i64: 1, 128>}, {transform_indices = @transform_5, window_bounds = array<i64: 8, 128>}, {transform_indices = @transform_6, window_bounds = array<i64: 8, 128>}]} {
    %c0 = arith.constant 0 : index
    %c0_0 = arith.constant 0 : index
    %0 = vector.load %arg1[%c0, %c0_0] : memref<8x784xf32, #tpu.memory_space<vmem>>, vector<8x784xf32>
    %1 = arith.truncf %0 : vector<8x784xf32> to vector<8x784xbf16>
    %c0_1 = arith.constant 0 : index
    %c0_2 = arith.constant 0 : index
    %2 = vector.load %arg2[%c0_1, %c0_2] : memref<784x784xbf16, #tpu.memory_space<vmem>>, vector<784x784xbf16>
    %cst = arith.constant dense<0.000000e+00> : vector<8x784xf32>
    %3 = tpu.matmul %1, %2, %cst {dimension_numbers = #tpu.dot_dimension_numbers<[1], [0], [0], [1], [0, 0, 1, 1], [], []>} : vector<8x784xbf16>, vector<784x784xbf16>, vector<8x784xf32> -> vector<8x784xf32>
    %c0_3 = arith.constant 0 : index
    %c0_4 = arith.constant 0 : index
    %4 = vector.load %arg3[%c0_3, %c0_4] : memref<1x784xf32, #tpu.memory_space<vmem>>, vector<1x784xf32>
    %5 = vector.broadcast %4 : vector<1x784xf32> to vector<8x784xf32>
    %6 = arith.addf %3, %5 : vector<8x784xf32>
    %cst_5 = arith.constant 0.000000e+00 : f32
    %7 = vector.broadcast %cst_5 : f32 to vector<8x784xf32>
    %8 = arith.maximumf %6, %7 : vector<8x784xf32>
    %9 = arith.truncf %8 : vector<8x784xf32> to vector<8x784xbf16>
    %c0_6 = arith.constant 0 : index
    %c0_7 = arith.constant 0 : index
    %10 = vector.load %arg4[%c0_6, %c0_7] : memref<784x128xbf16, #tpu.memory_space<vmem>>, vector<784x128xbf16>
    %cst_8 = arith.constant dense<0.000000e+00> : vector<8x128xf32>
    %11 = tpu.matmul %9, %10, %cst_8 {dimension_numbers = #tpu.dot_dimension_numbers<[1], [0], [0], [1], [0, 0, 1, 1], [], []>} : vector<8x784xbf16>, vector<784x128xbf16>, vector<8x128xf32> -> vector<8x128xf32>
    %c0_9 = arith.constant 0 : index
    %c0_10 = arith.constant 0 : index
    %12 = vector.load %arg5[%c0_9, %c0_10] : memref<1x128xf32, #tpu.memory_space<vmem>>, vector<1x128xf32>
    %13 = vector.broadcast %12 : vector<1x128xf32> to vector<8x128xf32>
    %14 = arith.addf %11, %13 : vector<8x128xf32>
    %cst_11 = arith.constant 0.000000e+00 : f32
    %15 = vector.broadcast %cst_11 : f32 to vector<8x128xf32>
    %16 = arith.maximumf %14, %15 : vector<8x128xf32>
    %c0_12 = arith.constant 0 : index
    %c0_13 = arith.constant 0 : index
    %17 = vector.load %arg6[%c0_12, %c0_13] : memref<8x128xf32, #tpu.memory_space<vmem>>, vector<8x128xf32>
    tpu.vector_store %arg6[%c0_12, %c0_13], %16 {strides = array<i32>} : memref<8x128xf32, #tpu.memory_space<vmem>>, vector<8x128xf32>,
    %18 = tpu.iota {dimensions = array<i32: 1>} : vector<8x128xi32>
    %c10_i32 = arith.constant 10 : i32
    %19 = vector.broadcast %c10_i32 : i32 to vector<8x128xi32>
    %20 = arith.cmpi slt, %18, %19 : vector<8x128xi32>
    %cst_14 = arith.constant 0xFF800000 : f32
    %21 = vector.broadcast %cst_14 : f32 to vector<8x128xf32>
    %22 = arith.select %20, %16, %21 : vector<8x128xi1>, vector<8x128xf32>
    %cst_15 = arith.constant dense<0xFF800000> : vector<8xf32>
    %23 = vector.multi_reduction <maximumf>, %22, %cst_15 [1] : vector<8x128xf32> to vector<8xf32>
    %24 = vector.shape_cast %23 : vector<8xf32> to vector<8x1xf32>
    %25 = vector.broadcast %24 : vector<8x1xf32> to vector<8x128xf32>
    %26 = arith.subf %22, %25 : vector<8x128xf32>
    %27 = math.exp %26 : vector<8x128xf32>
    %cst_16 = arith.constant dense<0.000000e+00> : vector<8xf32>
    %28 = vector.multi_reduction <add>, %27, %cst_16 [1] : vector<8x128xf32> to vector<8xf32>
    %29 = vector.shape_cast %28 : vector<8xf32> to vector<8x1xf32>
    %30 = tpu.reciprocal %29 {approx = true} : vector<8x1xf32> -> vector<8x1xf32>
    %31 = vector.broadcast %30 : vector<8x1xf32> to vector<8x128xf32>
    %32 = arith.mulf %27, %31 : vector<8x128xf32>
    %c0_17 = arith.constant 0 : index
    %c0_18 = arith.constant 0 : index
    %33 = vector.load %arg7[%c0_17, %c0_18] : memref<8x128xf32, #tpu.memory_space<vmem>>, vector<8x128xf32>
    tpu.vector_store %arg7[%c0_17, %c0_18], %32 {strides = array<i32>} : memref<8x128xf32, #tpu.memory_space<vmem>>, vector<8x128xf32>,
    return
  }
  func.func @transform_0(%arg0: i32) -> (i32, i32) {
    %c0_i32 = arith.constant 0 : i32
    %c0_i32_0 = arith.constant 0 : i32
    return %arg0, %c0_i32 : i32, i32
  }
  func.func @transform_1(%arg0: i32) -> (i32, i32) {
    %c0_i32 = arith.constant 0 : i32
    %c0_i32_0 = arith.constant 0 : i32
    %c0_i32_1 = arith.constant 0 : i32
    return %c0_i32, %c0_i32_0 : i32, i32
  }
  func.func @transform_2(%arg0: i32) -> (i32, i32) {
    %c0_i32 = arith.constant 0 : i32
    %c0_i32_0 = arith.constant 0 : i32
    %c0_i32_1 = arith.constant 0 : i32
    return %c0_i32, %c0_i32_0 : i32, i32
  }
  func.func @transform_3(%arg0: i32) -> (i32, i32) {
    %c0_i32 = arith.constant 0 : i32
    %c0_i32_0 = arith.constant 0 : i32
    %c0_i32_1 = arith.constant 0 : i32
    return %c0_i32, %c0_i32_0 : i32, i32
  }
  func.func @transform_4(%arg0: i32) -> (i32, i32) {
    %c0_i32 = arith.constant 0 : i32
    %c0_i32_0 = arith.constant 0 : i32
    %c0_i32_1 = arith.constant 0 : i32
    return %c0_i32, %c0_i32_0 : i32, i32
  }
  func.func @transform_5(%arg0: i32) -> (i32, i32) {
    %c0_i32 = arith.constant 0 : i32
    %c0_i32_0 = arith.constant 0 : i32
    return %arg0, %c0_i32 : i32, i32
  }
  func.func @transform_6(%arg0: i32) -> (i32, i32) {
    %c0_i32 = arith.constant 0 : i32
    %c0_i32_0 = arith.constant 0 : i32
    return %arg0, %c0_i32 : i32, i32
  }
}

</mosaic_0001>

<llo_original>
// kernel: tpu_custom_call.1
$region0: #{tpu_custom_call.1}
  #allocation0 [shape = 'u32[]', space=smem, size = 0x4, offset = 0x4, fixed_abs, tag = 'smem constant byte address 0x4 - core index']
  #allocation1 [shape = 'u32[144,128]{1,0:T(1,128)}', space=vmem, size = 0x12000, scoped, tag = 'internal scratch']
  %s0 = inlined_call_operand.hbm [shape: f32[8,784], index: 0, kind: input, shape index: {}]
  %s1 = inlined_call_operand.hbm [shape: bf16[784,784], index: 1, kind: input, shape index: {}]
  %s2 = inlined_call_operand.hbm [shape: f32[1,784], index: 2, kind: input, shape index: {}]
  %s3 = inlined_call_operand.hbm [shape: bf16[784,128], index: 3, kind: input, shape index: {}]
  %s4 = inlined_call_operand.hbm [shape: f32[1,128], index: 4, kind: input, shape index: {}]
  %s5 = inlined_call_operand.hbm [shape: f32[8,128], index: 5, kind: output, shape index: {0}]
  %s6 = inlined_call_operand.hbm [shape: f32[8,128], index: 6, kind: output, shape index: {1}]
  %7 = xla_tuple %s5, %s6
  %s8 = sld [smem:[#allocation0]]
  $region58: #{tpu_custom_call.1} parent=0
    _
  %s10 = ssub.s32 1, %s8
  %s11 = scalar_select 0, %s10, %s8
  $region1: #{tpu_custom_call.1} parent=0
    #allocation2 [shape = 'u8[28672]{0}', space=vmem, size = 0x7000, scoped, tag = 'input window, operand 0, single buffered']
    #allocation3 [shape = 's32[1]{0}', space=sflag, size = 0x4, scoped, tag = 'scoped memory for tpu_custom_call.1']
    #allocation4 [shape = 's32[1]{0}', space=sflag, size = 0x4, scoped, tag = 'scoped memory for tpu_custom_call.1']
    #allocation5 [shape = 'u8[1404928]{0}', space=vmem, size = 0x157000, scoped, tag = 'input window, operand 1, single buffered']
    #allocation6 [shape = 's32[1]{0}', space=sflag, size = 0x4, scoped, tag = 'scoped memory for tpu_custom_call.1']
    #allocation7 [shape = 'u8[3584]{0}', space=vmem, size = 0x1000, scoped, tag = 'input window, operand 2, single buffered']
    #allocation8 [shape = 'u8[200704]{0}', space=vmem, size = 0x31000, scoped, tag = 'input window, operand 3, single buffered']
    #allocation9 [shape = 's32[1]{0}', space=sflag, size = 0x4, scoped, tag = 'scoped memory for tpu_custom_call.1']
    #allocation10 [shape = 'u8[512]{0}', space=vmem, size = 0x400, scoped, tag = 'input window, operand 4, single buffered']
    #allocation11 [shape = 'u8[4096]{0}', space=vmem, size = 0x1000, scoped, tag = 'output window, operand 0, single buffered']
    #allocation12 [shape = 'u8[4096]{0}', space=vmem, size = 0x1000, scoped, tag = 'output window, operand 1, single buffered']
    #allocation13 [shape = 's32[1]{0}', space=sflag, size = 0x4, scoped, tag = 'scoped memory for tpu_custom_call.1']
    %12 = vsyncpa [#allocation3], 0
    %13 = vsyncpa [#allocation6], 0
    %14 = vsyncpa [#allocation9], 0
    %15 = vsyncpa [#allocation4], 0
    %16 = vsyncpa [#allocation13], 0
    // Predicated region
    $region2: #{tpu_custom_call.1} parent=1 // pred_check
      _
    $region3: #{tpu_custom_call.1} parent=1 // pred_check_branch
      %18 = sbr.rel (0) target = $region5
    $region4: #{tpu_custom_call.1} parent=1 // pred_region
      %s20 = ssub.s32 896, 896
      %21 = vsyncadd [#allocation3], %s20
      %s23 = sshll.u32 [#allocation2], 4
      %s24 = int_to_ptr.vmem [resolvable:$true] %s23
      %26 = dma.hbm_to_vmem [thread:$0]  %s0, 896, %s24, [#allocation3]
    $region5: #{tpu_custom_call.1} parent=1 // pred_fallthru
      _
    // Predicated region
    $region6: #{tpu_custom_call.1} parent=1 // pred_check
      _
    $region7: #{tpu_custom_call.1} parent=1 // pred_check_branch
      %28 = sbr.rel (0) target = $region9
    $region8: #{tpu_custom_call.1} parent=1 // pred_region
      %s30 = ssub.s32 43904, 43904
      %31 = vsyncadd [#allocation6], %s30
      %s32 = sshll.u32 [#allocation5], 4
      %s33 = int_to_ptr.vmem [resolvable:$true] %s32
      %38 = dma.hbm_to_vmem [thread:$0]  %s1, 43904, %s33, [#allocation6], 448, 448, 28
    $region9: #{tpu_custom_call.1} parent=1 // pred_fallthru
      _
    // Predicated region
    $region10: #{tpu_custom_call.1} parent=1 // pred_check
      _
    $region11: #{tpu_custom_call.1} parent=1 // pred_check_branch
      %40 = sbr.rel (0) target = $region13
    $region12: #{tpu_custom_call.1} parent=1 // pred_region
      %s42 = ssub.s32 112, 112
      %43 = vsyncadd [#allocation6], %s42
      %s45 = sshll.u32 [#allocation7], 4
      %s46 = int_to_ptr.vmem [resolvable:$true] %s45
      %48 = dma.hbm_to_vmem [thread:$0]  %s2, 112, %s46, [#allocation6]
    $region13: #{tpu_custom_call.1} parent=1 // pred_fallthru
      _
    // Predicated region
    $region14: #{tpu_custom_call.1} parent=1 // pred_check
      _
    $region15: #{tpu_custom_call.1} parent=1 // pred_check_branch
      %50 = sbr.rel (0) target = $region17
    $region16: #{tpu_custom_call.1} parent=1 // pred_region
      %s52 = ssub.s32 6272, 6272
      %53 = vsyncadd [#allocation9], %s52
      %s54 = sshll.u32 [#allocation8], 4
      %s55 = int_to_ptr.vmem [resolvable:$true] %s54
      %60 = dma.hbm_to_vmem [thread:$0]  %s3, 6272, %s55, [#allocation9], 64, 64, 4
    $region17: #{tpu_custom_call.1} parent=1 // pred_fallthru
      _
    // Predicated region
    $region18: #{tpu_custom_call.1} parent=1 // pred_check
      _
    $region19: #{tpu_custom_call.1} parent=1 // pred_check_branch
      %62 = sbr.rel (0) target = $region21
    $region20: #{tpu_custom_call.1} parent=1 // pred_region
      %s64 = ssub.s32 16, 16
      %65 = vsyncadd [#allocation9], %s64
      %s67 = sshll.u32 [#allocation10], 4
      %s68 = int_to_ptr.vmem [resolvable:$true] %s67
      %70 = dma.hbm_to_vmem [thread:$0]  %s4, 16, %s68, [#allocation9]
    $region21: #{tpu_custom_call.1} parent=1 // pred_fallthru
      _
    // Predicated region
    $region22: #{tpu_custom_call.1} parent=1 // pred_check
      _
    $region23: #{tpu_custom_call.1} parent=1 // pred_check_branch
      %72 = sbr.rel (0) target = $region25
    $region24: #{tpu_custom_call.1} parent=1 // pred_region
      %73 = dma.done [#allocation3], 896
    $region25: #{tpu_custom_call.1} parent=1 // pred_fallthru
      _
    // Predicated region
    $region26: #{tpu_custom_call.1} parent=1 // pred_check
      _
    $region27: #{tpu_custom_call.1} parent=1 // pred_check_branch
      %75 = sbr.rel (0) target = $region29
    $region28: #{tpu_custom_call.1} parent=1 // pred_region
      %76 = dma.done [#allocation6], 43904
    $region29: #{tpu_custom_call.1} parent=1 // pred_fallthru
      _
    // Predicated region
    $region30: #{tpu_custom_call.1} parent=1 // pred_check
      _
    $region31: #{tpu_custom_call.1} parent=1 // pred_check_branch
      %78 = sbr.rel (0) target = $region33
    $region32: #{tpu_custom_call.1} parent=1 // pred_region
      %79 = dma.done [#allocation6], 112
    $region33: #{tpu_custom_call.1} parent=1 // pred_fallthru
      _
    // Predicated region
    $region34: #{tpu_custom_call.1} parent=1 // pred_check
      _
    $region35: #{tpu_custom_call.1} parent=1 // pred_check_branch
      %81 = sbr.rel (0) target = $region37
    $region36: #{tpu_custom_call.1} parent=1 // pred_region
      %82 = dma.done [#allocation9], 6272
    $region37: #{tpu_custom_call.1} parent=1 // pred_fallthru
      _
    // Predicated region
    $region38: #{tpu_custom_call.1} parent=1 // pred_check
      _
    $region39: #{tpu_custom_call.1} parent=1 // pred_check_branch
      %84 = sbr.rel (0) target = $region41
    $region40: #{tpu_custom_call.1} parent=1 // pred_region
      %85 = dma.done [#allocation9], 16
    $region41: #{tpu_custom_call.1} parent=1 // pred_fallthru
      _
    %v87 = vld [vmem:[#allocation2] sm:$0xff]
    %v88 = vld [vmem:[#allocation2 + $0x8] sm:$0xff]
    %v89 = vld [vmem:[#allocation2 + $0x10] sm:$0xff]
    %v90 = vld [vmem:[#allocation2 + $0x18] sm:$0xff]
    %v91 = vld [vmem:[#allocation2 + $0x20] sm:$0xff]
    %v92 = vld [vmem:[#allocation2 + $0x28] sm:$0xff]
    %v93 = vld [vmem:[#allocation2 + $0x30] sm:$0xff]
    %v94 = vpack.c.bf16 %v87, %v87
    %v95 = vpack.c.bf16 %v88, %v88
    %v96 = vpack.c.bf16 %v89, %v89
    %v97 = vpack.c.bf16 %v90, %v90
    %v98 = vpack.c.bf16 %v91, %v91
    %v99 = vpack.c.bf16 %v92, %v92
    %v100 = vpack.c.bf16 %v93, %v93
    %v101 = vld [vmem:[#allocation5] sm:$0xff]
    %v102 = vld [vmem:[#allocation5 + $0x8] sm:$0xff]
    %v103 = vld [vmem:[#allocation5 + $0x10] sm:$0xff]
    %v104 = vld [vmem:[#allocation5 + $0x18] sm:$0xf]
    %v105 = vld [vmem:[#allocation5 + $0x1c] sm:$0xff]
    %v106 = vld [vmem:[#allocation5 + $0x24] sm:$0xff]
    %v107 = vld [vmem:[#allocation5 + $0x2c] sm:$0xff]
    %v108 = vld [vmem:[#allocation5 + $0x34] sm:$0xf]
    %v109 = vld [vmem:[#allocation5 + $0x38] sm:$0xff]
    %v110 = vld [vmem:[#allocation5 + $0x40] sm:$0xff]
    %v111 = vld [vmem:[#allocation5 + $0x48] sm:$0xff]
    %v112 = vld [vmem:[#allocation5 + $0x50] sm:$0xf]
    %v113 = vld [vmem:[#allocation5 + $0x54] sm:$0xff]
    %v114 = vld [vmem:[#allocation5 + $0x5c] sm:$0xff]
    %v115 = vld [vmem:[#allocation5 + $0x64] sm:$0xff]
    %v116 = vld [vmem:[#allocation5 + $0x6c] sm:$0xf]
    %v117 = vld [vmem:[#allocation5 + $0x70] sm:$0xff]
    %v118 = vld [vmem:[#allocation5 + $0x78] sm:$0xff]
    %v119 = vld [vmem:[#allocation5 + $0x80] sm:$0xff]
    %v120 = vld [vmem:[#allocation5 + $0x88] sm:$0xf]
    %v121 = vld [vmem:[#allocation5 + $0x8c] sm:$0xff]
    %v122 = vld [vmem:[#allocation5 + $0x94] sm:$0xff]
    %v123 = vld [vmem:[#allocation5 + $0x9c] sm:$0xff]
    %v124 = vld [vmem:[#allocation5 + $0xa4] sm:$0xf]
    %v125 = vld [vmem:[#allocation5 + $0xa8] sm:$0xff]
    %v126 = vld [vmem:[#allocation5 + $0xb0] sm:$0xff]
    %v127 = vld [vmem:[#allocation5 + $0xb8] sm:$0xff]
    %v128 = vld [vmem:[#allocation5 + $0xc0] sm:$0xf]
    %v129 = vld [vmem:[#allocation5 + $0xc4] sm:$0xff]
    %v130 = vld [vmem:[#allocation5 + $0xcc] sm:$0xff]
    %v131 = vld [vmem:[#allocation5 + $0xd4] sm:$0xff]
    %v132 = vld [vmem:[#allocation5 + $0xdc] sm:$0xf]
    %v133 = vld [vmem:[#allocation5 + $0xe0] sm:$0xff]
    %v134 = vld [vmem:[#allocation5 + $0xe8] sm:$0xff]
    %v135 = vld [vmem:[#allocation5 + $0xf0] sm:$0xff]
    %v136 = vld [vmem:[#allocation5 + $0xf8] sm:$0xf]
    %v137 = vld [vmem:[#allocation5 + $0xfc] sm:$0xff]
    %v138 = vld [vmem:[#allocation5 + $0x104] sm:$0xff]
    %v139 = vld [vmem:[#allocation5 + $0x10c] sm:$0xff]
    %v140 = vld [vmem:[#allocation5 + $0x114] sm:$0xf]
    %v141 = vld [vmem:[#allocation5 + $0x118] sm:$0xff]
    %v142 = vld [vmem:[#allocation5 + $0x120] sm:$0xff]
    %v143 = vld [vmem:[#allocation5 + $0x128] sm:$0xff]
    %v144 = vld [vmem:[#allocation5 + $0x130] sm:$0xf]
    %v145 = vld [vmem:[#allocation5 + $0x134] sm:$0xff]
    %v146 = vld [vmem:[#allocation5 + $0x13c] sm:$0xff]
    %v147 = vld [vmem:[#allocation5 + $0x144] sm:$0xff]
    %v148 = vld [vmem:[#allocation5 + $0x14c] sm:$0xf]
    %v149 = vld [vmem:[#allocation5 + $0x150] sm:$0xff]
    %v150 = vld [vmem:[#allocation5 + $0x158] sm:$0xff]
    %v151 = vld [vmem:[#allocation5 + $0x160] sm:$0xff]
    %v152 = vld [vmem:[#allocation5 + $0x168] sm:$0xf]
    %v153 = vld [vmem:[#allocation5 + $0x16c] sm:$0xff]
    %v154 = vld [vmem:[#allocation5 + $0x174] sm:$0xff]
    %v155 = vld [vmem:[#allocation5 + $0x17c] sm:$0xff]
    %v156 = vld [vmem:[#allocation5 + $0x184] sm:$0xf]
    %v157 = vld [vmem:[#allocation5 + $0x188] sm:$0xff]
    %v158 = vld [vmem:[#allocation5 + $0x190] sm:$0xff]
    %v159 = vld [vmem:[#allocation5 + $0x198] sm:$0xff]
    %v160 = vld [vmem:[#allocation5 + $0x1a0] sm:$0xf]
    %v161 = vld [vmem:[#allocation5 + $0x1a4] sm:$0xff]
    %v162 = vld [vmem:[#allocation5 + $0x1ac] sm:$0xff]
    %v163 = vld [vmem:[#allocation5 + $0x1b4] sm:$0xff]
    %v164 = vld [vmem:[#allocation5 + $0x1bc] sm:$0xf]
    %v165 = vld [vmem:[#allocation5 + $0x1c0] sm:$0xff]
    %v166 = vld [vmem:[#allocation5 + $0x1c8] sm:$0xff]
    %v167 = vld [vmem:[#allocation5 + $0x1d0] sm:$0xff]
    %v168 = vld [vmem:[#allocation5 + $0x1d8] sm:$0xf]
    %v169 = vld [vmem:[#allocation5 + $0x1dc] sm:$0xff]
    %v170 = vld [vmem:[#allocation5 + $0x1e4] sm:$0xff]
    %v171 = vld [vmem:[#allocation5 + $0x1ec] sm:$0xff]
    %v172 = vld [vmem:[#allocation5 + $0x1f4] sm:$0xf]
    %v173 = vld [vmem:[#allocation5 + $0x1f8] sm:$0xff]
    %v174 = vld [vmem:[#allocation5 + $0x200] sm:$0xff]
    %v175 = vld [vmem:[#allocation5 + $0x208] sm:$0xff]
    %v176 = vld [vmem:[#allocation5 + $0x210] sm:$0xf]
    %v177 = vld [vmem:[#allocation5 + $0x214] sm:$0xff]
    %v178 = vld [vmem:[#allocation5 + $0x21c] sm:$0xff]
    %v179 = vld [vmem:[#allocation5 + $0x224] sm:$0xff]
    %v180 = vld [vmem:[#allocation5 + $0x22c] sm:$0xf]
    %v181 = vld [vmem:[#allocation5 + $0x230] sm:$0xff]
    %v182 = vld [vmem:[#allocation5 + $0x238] sm:$0xff]
    %v183 = vld [vmem:[#allocation5 + $0x240] sm:$0xff]
    %v184 = vld [vmem:[#allocation5 + $0x248] sm:$0xf]
    %v185 = vld [vmem:[#allocation5 + $0x24c] sm:$0xff]
    %v186 = vld [vmem:[#allocation5 + $0x254] sm:$0xff]
    %v187 = vld [vmem:[#allocation5 + $0x25c] sm:$0xff]
    %v188 = vld [vmem:[#allocation5 + $0x264] sm:$0xf]
    %v189 = vld [vmem:[#allocation5 + $0x268] sm:$0xff]
    %v190 = vld [vmem:[#allocation5 + $0x270] sm:$0xff]
    %v191 = vld [vmem:[#allocation5 + $0x278] sm:$0xff]
    %v192 = vld [vmem:[#allocation5 + $0x280] sm:$0xf]
    %v193 = vld [vmem:[#allocation5 + $0x284] sm:$0xff]
    %v194 = vld [vmem:[#allocation5 + $0x28c] sm:$0xff]
    %v195 = vld [vmem:[#allocation5 + $0x294] sm:$0xff]
    %v196 = vld [vmem:[#allocation5 + $0x29c] sm:$0xf]
    %v197 = vld [vmem:[#allocation5 + $0x2a0] sm:$0xff]
    %v198 = vld [vmem:[#allocation5 + $0x2a8] sm:$0xff]
    %v199 = vld [vmem:[#allocation5 + $0x2b0] sm:$0xff]
    %v200 = vld [vmem:[#allocation5 + $0x2b8] sm:$0xf]
    %v201 = vld [vmem:[#allocation5 + $0x2bc] sm:$0xff]
    %v202 = vld [vmem:[#allocation5 + $0x2c4] sm:$0xff]
    %v203 = vld [vmem:[#allocation5 + $0x2cc] sm:$0xff]
    %v204 = vld [vmem:[#allocation5 + $0x2d4] sm:$0xf]
    %v205 = vld [vmem:[#allocation5 + $0x2d8] sm:$0xff]
    %v206 = vld [vmem:[#allocation5 + $0x2e0] sm:$0xff]
    %v207 = vld [vmem:[#allocation5 + $0x2e8] sm:$0xff]
    %v208 = vld [vmem:[#allocation5 + $0x2f0] sm:$0xf]
    %v209 = vld [vmem:[#allocation5 + $0x2f4] sm:$0xff]
    %v210 = vld [vmem:[#allocation5 + $0x2fc] sm:$0xff]
    %v211 = vld [vmem:[#allocation5 + $0x304] sm:$0xff]
    %v212 = vld [vmem:[#allocation5 + $0x30c] sm:$0xf]
    %v213 = vld [vmem:[#allocation5 + $0x310] sm:$0xff]
    %v214 = vld [vmem:[#allocation5 + $0x318] sm:$0xff]
    %v215 = vld [vmem:[#allocation5 + $0x320] sm:$0xff]
    %v216 = vld [vmem:[#allocation5 + $0x328] sm:$0xf]
    %v217 = vld [vmem:[#allocation5 + $0x32c] sm:$0xff]
    %v218 = vld [vmem:[#allocation5 + $0x334] sm:$0xff]
    %v219 = vld [vmem:[#allocation5 + $0x33c] sm:$0xff]
    %v220 = vld [vmem:[#allocation5 + $0x344] sm:$0xf]
    %v221 = vld [vmem:[#allocation5 + $0x348] sm:$0xff]
    %v222 = vld [vmem:[#allocation5 + $0x350] sm:$0xff]
    %v223 = vld [vmem:[#allocation5 + $0x358] sm:$0xff]
    %v224 = vld [vmem:[#allocation5 + $0x360] sm:$0xf]
    %v225 = vld [vmem:[#allocation5 + $0x364] sm:$0xff]
    %v226 = vld [vmem:[#allocation5 + $0x36c] sm:$0xff]
    %v227 = vld [vmem:[#allocation5 + $0x374] sm:$0xff]
    %v228 = vld [vmem:[#allocation5 + $0x37c] sm:$0xf]
    %v229 = vld [vmem:[#allocation5 + $0x380] sm:$0xff]
    %v230 = vld [vmem:[#allocation5 + $0x388] sm:$0xff]
    %v231 = vld [vmem:[#allocation5 + $0x390] sm:$0xff]
    %v232 = vld [vmem:[#allocation5 + $0x398] sm:$0xf]
    %v233 = vld [vmem:[#allocation5 + $0x39c] sm:$0xff]
    %v234 = vld [vmem:[#allocation5 + $0x3a4] sm:$0xff]
    %v235 = vld [vmem:[#allocation5 + $0x3ac] sm:$0xff]
    %v236 = vld [vmem:[#allocation5 + $0x3b4] sm:$0xf]
    %v237 = vld [vmem:[#allocation5 + $0x3b8] sm:$0xff]
    %v238 = vld [vmem:[#allocation5 + $0x3c0] sm:$0xff]
    %v239 = vld [vmem:[#allocation5 + $0x3c8] sm:$0xff]
    %v240 = vld [vmem:[#allocation5 + $0x3d0] sm:$0xf]
    %v241 = vld [vmem:[#allocation5 + $0x3d4] sm:$0xff]
    %v242 = vld [vmem:[#allocation5 + $0x3dc] sm:$0xff]
    %v243 = vld [vmem:[#allocation5 + $0x3e4] sm:$0xff]
    %v244 = vld [vmem:[#allocation5 + $0x3ec] sm:$0xf]
    %v245 = vld [vmem:[#allocation5 + $0x3f0] sm:$0xff]
    %v246 = vld [vmem:[#allocation5 + $0x3f8] sm:$0xff]
    %v247 = vld [vmem:[#allocation5 + $0x400] sm:$0xff]
    %v248 = vld [vmem:[#allocation5 + $0x408] sm:$0xf]
    %v249 = vld [vmem:[#allocation5 + $0x40c] sm:$0xff]
    %v250 = vld [vmem:[#allocation5 + $0x414] sm:$0xff]
    %v251 = vld [vmem:[#allocation5 + $0x41c] sm:$0xff]
    %v252 = vld [vmem:[#allocation5 + $0x424] sm:$0xf]
    %v253 = vld [vmem:[#allocation5 + $0x428] sm:$0xff]
    %v254 = vld [vmem:[#allocation5 + $0x430] sm:$0xff]
    %v255 = vld [vmem:[#allocation5 + $0x438] sm:$0xff]
    %v256 = vld [vmem:[#allocation5 + $0x440] sm:$0xf]
    %v257 = vld [vmem:[#allocation5 + $0x444] sm:$0xff]
    %v258 = vld [vmem:[#allocation5 + $0x44c] sm:$0xff]
    %v259 = vld [vmem:[#allocation5 + $0x454] sm:$0xff]
    %v260 = vld [vmem:[#allocation5 + $0x45c] sm:$0xf]
    %v261 = vld [vmem:[#allocation5 + $0x460] sm:$0xff]
    %v262 = vld [vmem:[#allocation5 + $0x468] sm:$0xff]
    %v263 = vld [vmem:[#allocation5 + $0x470] sm:$0xff]
    %v264 = vld [vmem:[#allocation5 + $0x478] sm:$0xf]
    %v265 = vld [vmem:[#allocation5 + $0x47c] sm:$0xff]
    %v266 = vld [vmem:[#allocation5 + $0x484] sm:$0xff]
    %v267 = vld [vmem:[#allocation5 + $0x48c] sm:$0xff]
    %v268 = vld [vmem:[#allocation5 + $0x494] sm:$0xf]
    %v269 = vld [vmem:[#allocation5 + $0x498] sm:$0xff]
    %v270 = vld [vmem:[#allocation5 + $0x4a0] sm:$0xff]
    %v271 = vld [vmem:[#allocation5 + $0x4a8] sm:$0xff]
    %v272 = vld [vmem:[#allocation5 + $0x4b0] sm:$0xf]
    %v273 = vld [vmem:[#allocation5 + $0x4b4] sm:$0xff]
    %v274 = vld [vmem:[#allocation5 + $0x4bc] sm:$0xff]
    %v275 = vld [vmem:[#allocation5 + $0x4c4] sm:$0xff]
    %v276 = vld [vmem:[#allocation5 + $0x4cc] sm:$0xf]
    %v277 = vld [vmem:[#allocation5 + $0x4d0] sm:$0xff]
    %v278 = vld [vmem:[#allocation5 + $0x4d8] sm:$0xff]
    %v279 = vld [vmem:[#allocation5 + $0x4e0] sm:$0xff]
    %v280 = vld [vmem:[#allocation5 + $0x4e8] sm:$0xf]
    %v281 = vld [vmem:[#allocation5 + $0x4ec] sm:$0xff]
    %v282 = vld [vmem:[#allocation5 + $0x4f4] sm:$0xff]
    %v283 = vld [vmem:[#allocation5 + $0x4fc] sm:$0xff]
    %v284 = vld [vmem:[#allocation5 + $0x504] sm:$0xf]
    %v285 = vld [vmem:[#allocation5 + $0x508] sm:$0xff]
    %v286 = vld [vmem:[#allocation5 + $0x510] sm:$0xff]
    %v287 = vld [vmem:[#allocation5 + $0x518] sm:$0xff]
    %v288 = vld [vmem:[#allocation5 + $0x520] sm:$0xf]
    %v289 = vld [vmem:[#allocation5 + $0x524] sm:$0xff]
    %v290 = vld [vmem:[#allocation5 + $0x52c] sm:$0xff]
    %v291 = vld [vmem:[#allocation5 + $0x534] sm:$0xff]
    %v292 = vld [vmem:[#allocation5 + $0x53c] sm:$0xf]
    %v293 = vld [vmem:[#allocation5 + $0x540] sm:$0xff]
    %v294 = vld [vmem:[#allocation5 + $0x548] sm:$0xff]
    %v295 = vld [vmem:[#allocation5 + $0x550] sm:$0xff]
    %v296 = vld [vmem:[#allocation5 + $0x558] sm:$0xf]
    %v297 = vld [vmem:[#allocation5 + $0x55c] sm:$0xff]
    %v298 = vld [vmem:[#allocation5 + $0x564] sm:$0xff]
    %v299 = vld [vmem:[#allocation5 + $0x56c] sm:$0xff]
    %v300 = vld [vmem:[#allocation5 + $0x574] sm:$0xf]
    %v301 = vld [vmem:[#allocation5 + $0x578] sm:$0xff]
    %v302 = vld [vmem:[#allocation5 + $0x580] sm:$0xff]
    %v303 = vld [vmem:[#allocation5 + $0x588] sm:$0xff]
    %v304 = vld [vmem:[#allocation5 + $0x590] sm:$0xf]
    %v305 = vld [vmem:[#allocation5 + $0x594] sm:$0xff]
    %v306 = vld [vmem:[#allocation5 + $0x59c] sm:$0xff]
    %v307 = vld [vmem:[#allocation5 + $0x5a4] sm:$0xff]
    %v308 = vld [vmem:[#allocation5 + $0x5ac] sm:$0xf]
    %v309 = vld [vmem:[#allocation5 + $0x5b0] sm:$0xff]
    %v310 = vld [vmem:[#allocation5 + $0x5b8] sm:$0xff]
    %v311 = vld [vmem:[#allocation5 + $0x5c0] sm:$0xff]
    %v312 = vld [vmem:[#allocation5 + $0x5c8] sm:$0xf]
    %v313 = vld [vmem:[#allocation5 + $0x5cc] sm:$0xff]
    %v314 = vld [vmem:[#allocation5 + $0x5d4] sm:$0xff]
    %v315 = vld [vmem:[#allocation5 + $0x5dc] sm:$0xff]
    %v316 = vld [vmem:[#allocation5 + $0x5e4] sm:$0xf]
    %v317 = vld [vmem:[#allocation5 + $0x5e8] sm:$0xff]
    %v318 = vld [vmem:[#allocation5 + $0x5f0] sm:$0xff]
    %v319 = vld [vmem:[#allocation5 + $0x5f8] sm:$0xff]
    %v320 = vld [vmem:[#allocation5 + $0x600] sm:$0xf]
    %v321 = vld [vmem:[#allocation5 + $0x604] sm:$0xff]
    %v322 = vld [vmem:[#allocation5 + $0x60c] sm:$0xff]
    %v323 = vld [vmem:[#allocation5 + $0x614] sm:$0xff]
    %v324 = vld [vmem:[#allocation5 + $0x61c] sm:$0xf]
    %v325 = vld [vmem:[#allocation5 + $0x620] sm:$0xff]
    %v326 = vld [vmem:[#allocation5 + $0x628] sm:$0xff]
    %v327 = vld [vmem:[#allocation5 + $0x630] sm:$0xff]
    %v328 = vld [vmem:[#allocation5 + $0x638] sm:$0xf]
    %v329 = vld [vmem:[#allocation5 + $0x63c] sm:$0xff]
    %v330 = vld [vmem:[#allocation5 + $0x644] sm:$0xff]
    %v331 = vld [vmem:[#allocation5 + $0x64c] sm:$0xff]
    %v332 = vld [vmem:[#allocation5 + $0x654] sm:$0xf]
    %v333 = vld [vmem:[#allocation5 + $0x658] sm:$0xff]
    %v334 = vld [vmem:[#allocation5 + $0x660] sm:$0xff]
    %v335 = vld [vmem:[#allocation5 + $0x668] sm:$0xff]
    %v336 = vld [vmem:[#allocation5 + $0x670] sm:$0xf]
    %v337 = vld [vmem:[#allocation5 + $0x674] sm:$0xff]
    %v338 = vld [vmem:[#allocation5 + $0x67c] sm:$0xff]
    %v339 = vld [vmem:[#allocation5 + $0x684] sm:$0xff]
    %v340 = vld [vmem:[#allocation5 + $0x68c] sm:$0xf]
    %v341 = vld [vmem:[#allocation5 + $0x690] sm:$0xff]
    %v342 = vld [vmem:[#allocation5 + $0x698] sm:$0xff]
    %v343 = vld [vmem:[#allocation5 + $0x6a0] sm:$0xff]
    %v344 = vld [vmem:[#allocation5 + $0x6a8] sm:$0xf]
    %v345 = vld [vmem:[#allocation5 + $0x6ac] sm:$0xff]
    %v346 = vld [vmem:[#allocation5 + $0x6b4] sm:$0xff]
    %v347 = vld [vmem:[#allocation5 + $0x6bc] sm:$0xff]
    %v348 = vld [vmem:[#allocation5 + $0x6c4] sm:$0xf]
    %v349 = vld [vmem:[#allocation5 + $0x6c8] sm:$0xff]
    %v350 = vld [vmem:[#allocation5 + $0x6d0] sm:$0xff]
    %v351 = vld [vmem:[#allocation5 + $0x6d8] sm:$0xff]
    %v352 = vld [vmem:[#allocation5 + $0x6e0] sm:$0xf]
    %v353 = vld [vmem:[#allocation5 + $0x6e4] sm:$0xff]
    %v354 = vld [vmem:[#allocation5 + $0x6ec] sm:$0xff]
    %v355 = vld [vmem:[#allocation5 + $0x6f4] sm:$0xff]
    %v356 = vld [vmem:[#allocation5 + $0x6fc] sm:$0xf]
    %v357 = vld [vmem:[#allocation5 + $0x700] sm:$0xff]
    %v358 = vld [vmem:[#allocation5 + $0x708] sm:$0xff]
    %v359 = vld [vmem:[#allocation5 + $0x710] sm:$0xff]
    %v360 = vld [vmem:[#allocation5 + $0x718] sm:$0xf]
    %v361 = vld [vmem:[#allocation5 + $0x71c] sm:$0xff]
    %v362 = vld [vmem:[#allocation5 + $0x724] sm:$0xff]
    %v363 = vld [vmem:[#allocation5 + $0x72c] sm:$0xff]
    %v364 = vld [vmem:[#allocation5 + $0x734] sm:$0xf]
    %v365 = vld [vmem:[#allocation5 + $0x738] sm:$0xff]
    %v366 = vld [vmem:[#allocation5 + $0x740] sm:$0xff]
    %v367 = vld [vmem:[#allocation5 + $0x748] sm:$0xff]
    %v368 = vld [vmem:[#allocation5 + $0x750] sm:$0xf]
    %v369 = vld [vmem:[#allocation5 + $0x754] sm:$0xff]
    %v370 = vld [vmem:[#allocation5 + $0x75c] sm:$0xff]
    %v371 = vld [vmem:[#allocation5 + $0x764] sm:$0xff]
    %v372 = vld [vmem:[#allocation5 + $0x76c] sm:$0xf]
    %v373 = vld [vmem:[#allocation5 + $0x770] sm:$0xff]
    %v374 = vld [vmem:[#allocation5 + $0x778] sm:$0xff]
    %v375 = vld [vmem:[#allocation5 + $0x780] sm:$0xff]
    %v376 = vld [vmem:[#allocation5 + $0x788] sm:$0xf]
    %v377 = vld [vmem:[#allocation5 + $0x78c] sm:$0xff]
    %v378 = vld [vmem:[#allocation5 + $0x794] sm:$0xff]
    %v379 = vld [vmem:[#allocation5 + $0x79c] sm:$0xff]
    %v380 = vld [vmem:[#allocation5 + $0x7a4] sm:$0xf]
    %v381 = vld [vmem:[#allocation5 + $0x7a8] sm:$0xff]
    %v382 = vld [vmem:[#allocation5 + $0x7b0] sm:$0xff]
    %v383 = vld [vmem:[#allocation5 + $0x7b8] sm:$0xff]
    %v384 = vld [vmem:[#allocation5 + $0x7c0] sm:$0xf]
    %v385 = vld [vmem:[#allocation5 + $0x7c4] sm:$0xff]
    %v386 = vld [vmem:[#allocation5 + $0x7cc] sm:$0xff]
    %v387 = vld [vmem:[#allocation5 + $0x7d4] sm:$0xff]
    %v388 = vld [vmem:[#allocation5 + $0x7dc] sm:$0xf]
    %v389 = vld [vmem:[#allocation5 + $0x7e0] sm:$0xff]
    %v390 = vld [vmem:[#allocation5 + $0x7e8] sm:$0xff]
    %v391 = vld [vmem:[#allocation5 + $0x7f0] sm:$0xff]
    %v392 = vld [vmem:[#allocation5 + $0x7f8] sm:$0xf]
    %v393 = vld [vmem:[#allocation5 + $0x7fc] sm:$0xff]
    %v394 = vld [vmem:[#allocation5 + $0x804] sm:$0xff]
    %v395 = vld [vmem:[#allocation5 + $0x80c] sm:$0xff]
    %v396 = vld [vmem:[#allocation5 + $0x814] sm:$0xf]
    %v397 = vld [vmem:[#allocation5 + $0x818] sm:$0xff]
    %v398 = vld [vmem:[#allocation5 + $0x820] sm:$0xff]
    %v399 = vld [vmem:[#allocation5 + $0x828] sm:$0xff]
    %v400 = vld [vmem:[#allocation5 + $0x830] sm:$0xf]
    %v401 = vld [vmem:[#allocation5 + $0x834] sm:$0xff]
    %v402 = vld [vmem:[#allocation5 + $0x83c] sm:$0xff]
    %v403 = vld [vmem:[#allocation5 + $0x844] sm:$0xff]
    %v404 = vld [vmem:[#allocation5 + $0x84c] sm:$0xf]
    %v405 = vld [vmem:[#allocation5 + $0x850] sm:$0xff]
    %v406 = vld [vmem:[#allocation5 + $0x858] sm:$0xff]
    %v407 = vld [vmem:[#allocation5 + $0x860] sm:$0xff]
    %v408 = vld [vmem:[#allocation5 + $0x868] sm:$0xf]
    %v409 = vld [vmem:[#allocation5 + $0x86c] sm:$0xff]
    %v410 = vld [vmem:[#allocation5 + $0x874] sm:$0xff]
    %v411 = vld [vmem:[#allocation5 + $0x87c] sm:$0xff]
    %v412 = vld [vmem:[#allocation5 + $0x884] sm:$0xf]
    %v413 = vld [vmem:[#allocation5 + $0x888] sm:$0xff]
    %v414 = vld [vmem:[#allocation5 + $0x890] sm:$0xff]
    %v415 = vld [vmem:[#allocation5 + $0x898] sm:$0xff]
    %v416 = vld [vmem:[#allocation5 + $0x8a0] sm:$0xf]
    %v417 = vld [vmem:[#allocation5 + $0x8a4] sm:$0xff]
    %v418 = vld [vmem:[#allocation5 + $0x8ac] sm:$0xff]
    %v419 = vld [vmem:[#allocation5 + $0x8b4] sm:$0xff]
    %v420 = vld [vmem:[#allocation5 + $0x8bc] sm:$0xf]
    %v421 = vld [vmem:[#allocation5 + $0x8c0] sm:$0xff]
    %v422 = vld [vmem:[#allocation5 + $0x8c8] sm:$0xff]
    %v423 = vld [vmem:[#allocation5 + $0x8d0] sm:$0xff]
    %v424 = vld [vmem:[#allocation5 + $0x8d8] sm:$0xf]
    %v425 = vld [vmem:[#allocation5 + $0x8dc] sm:$0xff]
    %v426 = vld [vmem:[#allocation5 + $0x8e4] sm:$0xff]
    %v427 = vld [vmem:[#allocation5 + $0x8ec] sm:$0xff]
    %v428 = vld [vmem:[#allocation5 + $0x8f4] sm:$0xf]
    %v429 = vld [vmem:[#allocation5 + $0x8f8] sm:$0xff]
    %v430 = vld [vmem:[#allocation5 + $0x900] sm:$0xff]
    %v431 = vld [vmem:[#allocation5 + $0x908] sm:$0xff]
    %v432 = vld [vmem:[#allocation5 + $0x910] sm:$0xf]
    %v433 = vld [vmem:[#allocation5 + $0x914] sm:$0xff]
    %v434 = vld [vmem:[#allocation5 + $0x91c] sm:$0xff]
    %v435 = vld [vmem:[#allocation5 + $0x924] sm:$0xff]
    %v436 = vld [vmem:[#allocation5 + $0x92c] sm:$0xf]
    %v437 = vld [vmem:[#allocation5 + $0x930] sm:$0xff]
    %v438 = vld [vmem:[#allocation5 + $0x938] sm:$0xff]
    %v439 = vld [vmem:[#allocation5 + $0x940] sm:$0xff]
    %v440 = vld [vmem:[#allocation5 + $0x948] sm:$0xf]
    %v441 = vld [vmem:[#allocation5 + $0x94c] sm:$0xff]
    %v442 = vld [vmem:[#allocation5 + $0x954] sm:$0xff]
    %v443 = vld [vmem:[#allocation5 + $0x95c] sm:$0xff]
    %v444 = vld [vmem:[#allocation5 + $0x964] sm:$0xf]
    %v445 = vld [vmem:[#allocation5 + $0x968] sm:$0xff]
    %v446 = vld [vmem:[#allocation5 + $0x970] sm:$0xff]
    %v447 = vld [vmem:[#allocation5 + $0x978] sm:$0xff]
    %v448 = vld [vmem:[#allocation5 + $0x980] sm:$0xf]
    %v449 = vld [vmem:[#allocation5 + $0x984] sm:$0xff]
    %v450 = vld [vmem:[#allocation5 + $0x98c] sm:$0xff]
    %v451 = vld [vmem:[#allocation5 + $0x994] sm:$0xff]
    %v452 = vld [vmem:[#allocation5 + $0x99c] sm:$0xf]
    %v453 = vld [vmem:[#allocation5 + $0x9a0] sm:$0xff]
    %v454 = vld [vmem:[#allocation5 + $0x9a8] sm:$0xff]
    %v455 = vld [vmem:[#allocation5 + $0x9b0] sm:$0xff]
    %v456 = vld [vmem:[#allocation5 + $0x9b8] sm:$0xf]
    %v457 = vld [vmem:[#allocation5 + $0x9bc] sm:$0xff]
    %v458 = vld [vmem:[#allocation5 + $0x9c4] sm:$0xff]
    %v459 = vld [vmem:[#allocation5 + $0x9cc] sm:$0xff]
    %v460 = vld [vmem:[#allocation5 + $0x9d4] sm:$0xf]
    %v461 = vld [vmem:[#allocation5 + $0x9d8] sm:$0xff]
    %v462 = vld [vmem:[#allocation5 + $0x9e0] sm:$0xff]
    %v463 = vld [vmem:[#allocation5 + $0x9e8] sm:$0xff]
    %v464 = vld [vmem:[#allocation5 + $0x9f0] sm:$0xf]
    %v465 = vld [vmem:[#allocation5 + $0x9f4] sm:$0xff]
    %v466 = vld [vmem:[#allocation5 + $0x9fc] sm:$0xff]
    %v467 = vld [vmem:[#allocation5 + $0xa04] sm:$0xff]
    %v468 = vld [vmem:[#allocation5 + $0xa0c] sm:$0xf]
    %v469 = vld [vmem:[#allocation5 + $0xa10] sm:$0xff]
    %v470 = vld [vmem:[#allocation5 + $0xa18] sm:$0xff]
    %v471 = vld [vmem:[#allocation5 + $0xa20] sm:$0xff]
    %v472 = vld [vmem:[#allocation5 + $0xa28] sm:$0xf]
    %v473 = vld [vmem:[#allocation5 + $0xa2c] sm:$0xff]
    %v474 = vld [vmem:[#allocation5 + $0xa34] sm:$0xff]
    %v475 = vld [vmem:[#allocation5 + $0xa3c] sm:$0xff]
    %v476 = vld [vmem:[#allocation5 + $0xa44] sm:$0xf]
    %v477 = vld [vmem:[#allocation5 + $0xa48] sm:$0xff]
    %v478 = vld [vmem:[#allocation5 + $0xa50] sm:$0xff]
    %v479 = vld [vmem:[#allocation5 + $0xa58] sm:$0xff]
    %v480 = vld [vmem:[#allocation5 + $0xa60] sm:$0xf]
    %v481 = vld [vmem:[#allocation5 + $0xa64] sm:$0xff]
    %v482 = vld [vmem:[#allocation5 + $0xa6c] sm:$0xff]
    %v483 = vld [vmem:[#allocation5 + $0xa74] sm:$0xff]
    %v484 = vld [vmem:[#allocation5 + $0xa7c] sm:$0xf]
    %v485 = vld [vmem:[#allocation5 + $0xa80] sm:$0xff]
    %v486 = vld [vmem:[#allocation5 + $0xa88] sm:$0xff]
    %v487 = vld [vmem:[#allocation5 + $0xa90] sm:$0xff]
    %v488 = vld [vmem:[#allocation5 + $0xa98] sm:$0xf]
    %v489 = vld [vmem:[#allocation5 + $0xa9c] sm:$0xff]
    %v490 = vld [vmem:[#allocation5 + $0xaa4] sm:$0xff]
    %v491 = vld [vmem:[#allocation5 + $0xaac] sm:$0xff]
    %v492 = vld [vmem:[#allocation5 + $0xab4] sm:$0xf]
    %v493 = vld [vmem:[#allocation7] sm:$0x7f]
    %v495 = vlaneseq
    %v496 = vshrl.u32 %v495, 7
    %v497 = vsub.s32 0, %v496
    %v498 = vrot.slane %v493, %v497
    %v499 = vlaneseq
    %v500 = vshrl.u32 %v499, 7
    %v501 = vsub.s32 1, %v500
    %v502 = vrot.slane %v493, %v501
    %v503 = vlaneseq
    %v504 = vshrl.u32 %v503, 7
    %v505 = vsub.s32 2, %v504
    %v506 = vrot.slane %v493, %v505
    %v507 = vlaneseq
    %v508 = vshrl.u32 %v507, 7
    %v509 = vsub.s32 3, %v508
    %v510 = vrot.slane %v493, %v509
    %v511 = vlaneseq
    %v512 = vshrl.u32 %v511, 7
    %v513 = vsub.s32 4, %v512
    %v514 = vrot.slane %v493, %v513
    %v515 = vlaneseq
    %v516 = vshrl.u32 %v515, 7
    %v517 = vsub.s32 5, %v516
    %v518 = vrot.slane %v493, %v517
    %v519 = vlaneseq
    %v520 = vshrl.u32 %v519, 7
    %v521 = vsub.s32 6, %v520
    %v522 = vrot.slane %v493, %v521
    %v922 = vunpack.c.l.b16 %v101
    %v923 = vunpack.c.h.b16 %v101
    %v924 = vunpack.c.l.b16 %v102
    %v925 = vunpack.c.h.b16 %v102
    %v926 = vunpack.c.l.b16 %v103
    %v927 = vunpack.c.h.b16 %v103
    %v928 = vunpack.c.l.b16 %v104
    %v929 = vunpack.c.l.b16 %v105
    %v930 = vunpack.c.h.b16 %v105
    %v931 = vunpack.c.l.b16 %v106
    %v932 = vunpack.c.h.b16 %v106
    %v933 = vunpack.c.l.b16 %v107
    %v934 = vunpack.c.h.b16 %v107
    %v935 = vunpack.c.l.b16 %v108
    %v936 = vunpack.c.l.b16 %v109
    %v937 = vunpack.c.h.b16 %v109
    %v938 = vunpack.c.l.b16 %v110
    %v939 = vunpack.c.h.b16 %v110
    %v940 = vunpack.c.l.b16 %v111
    %v941 = vunpack.c.h.b16 %v111
    %v942 = vunpack.c.l.b16 %v112
    %v943 = vunpack.c.l.b16 %v113
    %v944 = vunpack.c.h.b16 %v113
    %v945 = vunpack.c.l.b16 %v114
    %v946 = vunpack.c.h.b16 %v114
    %v947 = vunpack.c.l.b16 %v115
    %v948 = vunpack.c.h.b16 %v115
    %v949 = vunpack.c.l.b16 %v116
    %v950 = vunpack.c.l.b16 %v117
    %v951 = vunpack.c.h.b16 %v117
    %v952 = vunpack.c.l.b16 %v118
    %v953 = vunpack.c.h.b16 %v118
    %v954 = vunpack.c.l.b16 %v119
    %v955 = vunpack.c.h.b16 %v119
    %v956 = vunpack.c.l.b16 %v120
    %v957 = vunpack.c.l.b16 %v121
    %v958 = vunpack.c.h.b16 %v121
    %v959 = vunpack.c.l.b16 %v122
    %v960 = vunpack.c.h.b16 %v122
    %v961 = vunpack.c.l.b16 %v123
    %v962 = vunpack.c.h.b16 %v123
    %v963 = vunpack.c.l.b16 %v124
    %v964 = vunpack.c.l.b16 %v125
    %v965 = vunpack.c.h.b16 %v125
    %v966 = vunpack.c.l.b16 %v126
    %v967 = vunpack.c.h.b16 %v126
    %v968 = vunpack.c.l.b16 %v127
    %v969 = vunpack.c.h.b16 %v127
    %v970 = vunpack.c.l.b16 %v128
    %v971 = vunpack.c.l.b16 %v129
    %v972 = vunpack.c.h.b16 %v129
    %v973 = vunpack.c.l.b16 %v130
    %v974 = vunpack.c.h.b16 %v130
    %v975 = vunpack.c.l.b16 %v131
    %v976 = vunpack.c.h.b16 %v131
    %v977 = vunpack.c.l.b16 %v132
    %v978 = vunpack.c.l.b16 %v133
    %v979 = vunpack.c.h.b16 %v133
    %v980 = vunpack.c.l.b16 %v134
    %v981 = vunpack.c.h.b16 %v134
    %v982 = vunpack.c.l.b16 %v135
    %v983 = vunpack.c.h.b16 %v135
    %v984 = vunpack.c.l.b16 %v136
    %v985 = vunpack.c.l.b16 %v137
    %v986 = vunpack.c.h.b16 %v137
    %v987 = vunpack.c.l.b16 %v138
    %v988 = vunpack.c.h.b16 %v138
    %v989 = vunpack.c.l.b16 %v139
    %v990 = vunpack.c.h.b16 %v139
    %v991 = vunpack.c.l.b16 %v140
    %v992 = vunpack.c.l.b16 %v141
    %v993 = vunpack.c.h.b16 %v141
    %v994 = vunpack.c.l.b16 %v142
    %v995 = vunpack.c.h.b16 %v142
    %v996 = vunpack.c.l.b16 %v143
    %v997 = vunpack.c.h.b16 %v143
    %v998 = vunpack.c.l.b16 %v144
    %v999 = vunpack.c.l.b16 %v145
    %v1000 = vunpack.c.h.b16 %v145
    %v1001 = vunpack.c.l.b16 %v146
    %v1002 = vunpack.c.h.b16 %v146
    %v1003 = vunpack.c.l.b16 %v147
    %v1004 = vunpack.c.h.b16 %v147
    %v1005 = vunpack.c.l.b16 %v148
    %v1006 = vunpack.c.l.b16 %v149
    %v1007 = vunpack.c.h.b16 %v149
    %v1008 = vunpack.c.l.b16 %v150
    %v1009 = vunpack.c.h.b16 %v150
    %v1010 = vunpack.c.l.b16 %v151
    %v1011 = vunpack.c.h.b16 %v151
    %v1012 = vunpack.c.l.b16 %v152
    %v1013 = vunpack.c.l.b16 %v153
    %v1014 = vunpack.c.h.b16 %v153
    %v1015 = vunpack.c.l.b16 %v154
    %v1016 = vunpack.c.h.b16 %v154
    %v1017 = vunpack.c.l.b16 %v155
    %v1018 = vunpack.c.h.b16 %v155
    %v1019 = vunpack.c.l.b16 %v156
    %v1020 = vunpack.c.l.b16 %v157
    %v1021 = vunpack.c.h.b16 %v157
    %v1022 = vunpack.c.l.b16 %v158
    %v1023 = vunpack.c.h.b16 %v158
    %v1024 = vunpack.c.l.b16 %v159
    %v1025 = vunpack.c.h.b16 %v159
    %v1026 = vunpack.c.l.b16 %v160
    %v1027 = vunpack.c.l.b16 %v161
    %v1028 = vunpack.c.h.b16 %v161
    %v1029 = vunpack.c.l.b16 %v162
    %v1030 = vunpack.c.h.b16 %v162
    %v1031 = vunpack.c.l.b16 %v163
    %v1032 = vunpack.c.h.b16 %v163
    %v1033 = vunpack.c.l.b16 %v164
    %v1034 = vunpack.c.l.b16 %v165
    %v1035 = vunpack.c.h.b16 %v165
    %v1036 = vunpack.c.l.b16 %v166
    %v1037 = vunpack.c.h.b16 %v166
    %v1038 = vunpack.c.l.b16 %v167
    %v1039 = vunpack.c.h.b16 %v167
    %v1040 = vunpack.c.l.b16 %v168
    %v1041 = vunpack.c.l.b16 %v169
    %v1042 = vunpack.c.h.b16 %v169
    %v1043 = vunpack.c.l.b16 %v170
    %v1044 = vunpack.c.h.b16 %v170
    %v1045 = vunpack.c.l.b16 %v171
    %v1046 = vunpack.c.h.b16 %v171
    %v1047 = vunpack.c.l.b16 %v172
    %v1048 = vunpack.c.l.b16 %v173
    %v1049 = vunpack.c.h.b16 %v173
    %v1050 = vunpack.c.l.b16 %v174
    %v1051 = vunpack.c.h.b16 %v174
    %v1052 = vunpack.c.l.b16 %v175
    %v1053 = vunpack.c.h.b16 %v175
    %v1054 = vunpack.c.l.b16 %v176
    %v1055 = vunpack.c.l.b16 %v177
    %v1056 = vunpack.c.h.b16 %v177
    %v1057 = vunpack.c.l.b16 %v178
    %v1058 = vunpack.c.h.b16 %v178
    %v1059 = vunpack.c.l.b16 %v179
    %v1060 = vunpack.c.h.b16 %v179
    %v1061 = vunpack.c.l.b16 %v180
    %v1062 = vunpack.c.l.b16 %v181
    %v1063 = vunpack.c.h.b16 %v181
    %v1064 = vunpack.c.l.b16 %v182
    %v1065 = vunpack.c.h.b16 %v182
    %v1066 = vunpack.c.l.b16 %v183
    %v1067 = vunpack.c.h.b16 %v183
    %v1068 = vunpack.c.l.b16 %v184
    %v1069 = vunpack.c.l.b16 %v185
    %v1070 = vunpack.c.h.b16 %v185
    %v1071 = vunpack.c.l.b16 %v186
    %v1072 = vunpack.c.h.b16 %v186
    %v1073 = vunpack.c.l.b16 %v187
    %v1074 = vunpack.c.h.b16 %v187
    %v1075 = vunpack.c.l.b16 %v188
    %v1076 = vunpack.c.l.b16 %v189
    %v1077 = vunpack.c.h.b16 %v189
    %v1078 = vunpack.c.l.b16 %v190
    %v1079 = vunpack.c.h.b16 %v190
    %v1080 = vunpack.c.l.b16 %v191
    %v1081 = vunpack.c.h.b16 %v191
    %v1082 = vunpack.c.l.b16 %v192
    %v1083 = vunpack.c.l.b16 %v193
    %v1084 = vunpack.c.h.b16 %v193
    %v1085 = vunpack.c.l.b16 %v194
    %v1086 = vunpack.c.h.b16 %v194
    %v1087 = vunpack.c.l.b16 %v195
    %v1088 = vunpack.c.h.b16 %v195
    %v1089 = vunpack.c.l.b16 %v196
    %v1090 = vunpack.c.l.b16 %v197
    %v1091 = vunpack.c.h.b16 %v197
    %v1092 = vunpack.c.l.b16 %v198
    %v1093 = vunpack.c.h.b16 %v198
    %v1094 = vunpack.c.l.b16 %v199
    %v1095 = vunpack.c.h.b16 %v199
    %v1096 = vunpack.c.l.b16 %v200
    %v1097 = vunpack.c.l.b16 %v201
    %v1098 = vunpack.c.h.b16 %v201
    %v1099 = vunpack.c.l.b16 %v202
    %v1100 = vunpack.c.h.b16 %v202
    %v1101 = vunpack.c.l.b16 %v203
    %v1102 = vunpack.c.h.b16 %v203
    %v1103 = vunpack.c.l.b16 %v204
    %v1104 = vunpack.c.l.b16 %v205
    %v1105 = vunpack.c.h.b16 %v205
    %v1106 = vunpack.c.l.b16 %v206
    %v1107 = vunpack.c.h.b16 %v206
    %v1108 = vunpack.c.l.b16 %v207
    %v1109 = vunpack.c.h.b16 %v207
    %v1110 = vunpack.c.l.b16 %v208
    %v1111 = vunpack.c.l.b16 %v209
    %v1112 = vunpack.c.h.b16 %v209
    %v1113 = vunpack.c.l.b16 %v210
    %v1114 = vunpack.c.h.b16 %v210
    %v1115 = vunpack.c.l.b16 %v211
    %v1116 = vunpack.c.h.b16 %v211
    %v1117 = vunpack.c.l.b16 %v212
    %v1118 = vunpack.c.l.b16 %v213
    %v1119 = vunpack.c.h.b16 %v213
    %v1120 = vunpack.c.l.b16 %v214
    %v1121 = vunpack.c.h.b16 %v214
    %v1122 = vunpack.c.l.b16 %v215
    %v1123 = vunpack.c.h.b16 %v215
    %v1124 = vunpack.c.l.b16 %v216
    %v1125 = vunpack.c.l.b16 %v217
    %v1126 = vunpack.c.h.b16 %v217
    %v1127 = vunpack.c.l.b16 %v218
    %v1128 = vunpack.c.h.b16 %v218
    %v1129 = vunpack.c.l.b16 %v219
    %v1130 = vunpack.c.h.b16 %v219
    %v1131 = vunpack.c.l.b16 %v220
    %v1132 = vunpack.c.l.b16 %v221
    %v1133 = vunpack.c.h.b16 %v221
    %v1134 = vunpack.c.l.b16 %v222
    %v1135 = vunpack.c.h.b16 %v222
    %v1136 = vunpack.c.l.b16 %v223
    %v1137 = vunpack.c.h.b16 %v223
    %v1138 = vunpack.c.l.b16 %v224
    %v1139 = vunpack.c.l.b16 %v225
    %v1140 = vunpack.c.h.b16 %v225
    %v1141 = vunpack.c.l.b16 %v226
    %v1142 = vunpack.c.h.b16 %v226
    %v1143 = vunpack.c.l.b16 %v227
    %v1144 = vunpack.c.h.b16 %v227
    %v1145 = vunpack.c.l.b16 %v228
    %v1146 = vunpack.c.l.b16 %v229
    %v1147 = vunpack.c.h.b16 %v229
    %v1148 = vunpack.c.l.b16 %v230
    %v1149 = vunpack.c.h.b16 %v230
    %v1150 = vunpack.c.l.b16 %v231
    %v1151 = vunpack.c.h.b16 %v231
    %v1152 = vunpack.c.l.b16 %v232
    %v1153 = vunpack.c.l.b16 %v233
    %v1154 = vunpack.c.h.b16 %v233
    %v1155 = vunpack.c.l.b16 %v234
    %v1156 = vunpack.c.h.b16 %v234
    %v1157 = vunpack.c.l.b16 %v235
    %v1158 = vunpack.c.h.b16 %v235
    %v1159 = vunpack.c.l.b16 %v236
    %v1160 = vunpack.c.l.b16 %v237
    %v1161 = vunpack.c.h.b16 %v237
    %v1162 = vunpack.c.l.b16 %v238
    %v1163 = vunpack.c.h.b16 %v238
    %v1164 = vunpack.c.l.b16 %v239
    %v1165 = vunpack.c.h.b16 %v239
    %v1166 = vunpack.c.l.b16 %v240
    %v1167 = vunpack.c.l.b16 %v241
    %v1168 = vunpack.c.h.b16 %v241
    %v1169 = vunpack.c.l.b16 %v242
    %v1170 = vunpack.c.h.b16 %v242
    %v1171 = vunpack.c.l.b16 %v243
    %v1172 = vunpack.c.h.b16 %v243
    %v1173 = vunpack.c.l.b16 %v244
    %v1174 = vunpack.c.l.b16 %v245
    %v1175 = vunpack.c.h.b16 %v245
    %v1176 = vunpack.c.l.b16 %v246
    %v1177 = vunpack.c.h.b16 %v246
    %v1178 = vunpack.c.l.b16 %v247
    %v1179 = vunpack.c.h.b16 %v247
    %v1180 = vunpack.c.l.b16 %v248
    %v1181 = vunpack.c.l.b16 %v249
    %v1182 = vunpack.c.h.b16 %v249
    %v1183 = vunpack.c.l.b16 %v250
    %v1184 = vunpack.c.h.b16 %v250
    %v1185 = vunpack.c.l.b16 %v251
    %v1186 = vunpack.c.h.b16 %v251
    %v1187 = vunpack.c.l.b16 %v252
    %v1188 = vunpack.c.l.b16 %v253
    %v1189 = vunpack.c.h.b16 %v253
    %v1190 = vunpack.c.l.b16 %v254
    %v1191 = vunpack.c.h.b16 %v254
    %v1192 = vunpack.c.l.b16 %v255
    %v1193 = vunpack.c.h.b16 %v255
    %v1194 = vunpack.c.l.b16 %v256
    %v1195 = vunpack.c.l.b16 %v257
    %v1196 = vunpack.c.h.b16 %v257
    %v1197 = vunpack.c.l.b16 %v258
    %v1198 = vunpack.c.h.b16 %v258
    %v1199 = vunpack.c.l.b16 %v259
    %v1200 = vunpack.c.h.b16 %v259
    %v1201 = vunpack.c.l.b16 %v260
    %v1202 = vunpack.c.l.b16 %v261
    %v1203 = vunpack.c.h.b16 %v261
    %v1204 = vunpack.c.l.b16 %v262
    %v1205 = vunpack.c.h.b16 %v262
    %v1206 = vunpack.c.l.b16 %v263
    %v1207 = vunpack.c.h.b16 %v263
    %v1208 = vunpack.c.l.b16 %v264
    %v1209 = vunpack.c.l.b16 %v265
    %v1210 = vunpack.c.h.b16 %v265
    %v1211 = vunpack.c.l.b16 %v266
    %v1212 = vunpack.c.h.b16 %v266
    %v1213 = vunpack.c.l.b16 %v267
    %v1214 = vunpack.c.h.b16 %v267
    %v1215 = vunpack.c.l.b16 %v268
    %v1216 = vunpack.c.l.b16 %v269
    %v1217 = vunpack.c.h.b16 %v269
    %v1218 = vunpack.c.l.b16 %v270
    %v1219 = vunpack.c.h.b16 %v270
    %v1220 = vunpack.c.l.b16 %v271
    %v1221 = vunpack.c.h.b16 %v271
    %v1222 = vunpack.c.l.b16 %v272
    %v1223 = vunpack.c.l.b16 %v273
    %v1224 = vunpack.c.h.b16 %v273
    %v1225 = vunpack.c.l.b16 %v274
    %v1226 = vunpack.c.h.b16 %v274
    %v1227 = vunpack.c.l.b16 %v275
    %v1228 = vunpack.c.h.b16 %v275
    %v1229 = vunpack.c.l.b16 %v276
    %v1230 = vunpack.c.l.b16 %v277
    %v1231 = vunpack.c.h.b16 %v277
    %v1232 = vunpack.c.l.b16 %v278
    %v1233 = vunpack.c.h.b16 %v278
    %v1234 = vunpack.c.l.b16 %v279
    %v1235 = vunpack.c.h.b16 %v279
    %v1236 = vunpack.c.l.b16 %v280
    %v1237 = vunpack.c.l.b16 %v281
    %v1238 = vunpack.c.h.b16 %v281
    %v1239 = vunpack.c.l.b16 %v282
    %v1240 = vunpack.c.h.b16 %v282
    %v1241 = vunpack.c.l.b16 %v283
    %v1242 = vunpack.c.h.b16 %v283
    %v1243 = vunpack.c.l.b16 %v284
    %v1244 = vunpack.c.l.b16 %v285
    %v1245 = vunpack.c.h.b16 %v285
    %v1246 = vunpack.c.l.b16 %v286
    %v1247 = vunpack.c.h.b16 %v286
    %v1248 = vunpack.c.l.b16 %v287
    %v1249 = vunpack.c.h.b16 %v287
    %v1250 = vunpack.c.l.b16 %v288
    %v1251 = vunpack.c.l.b16 %v289
    %v1252 = vunpack.c.h.b16 %v289
    %v1253 = vunpack.c.l.b16 %v290
    %v1254 = vunpack.c.h.b16 %v290
    %v1255 = vunpack.c.l.b16 %v291
    %v1256 = vunpack.c.h.b16 %v291
    %v1257 = vunpack.c.l.b16 %v292
    %v1258 = vunpack.c.l.b16 %v293
    %v1259 = vunpack.c.h.b16 %v293
    %v1260 = vunpack.c.l.b16 %v294
    %v1261 = vunpack.c.h.b16 %v294
    %v1262 = vunpack.c.l.b16 %v295
    %v1263 = vunpack.c.h.b16 %v295
    %v1264 = vunpack.c.l.b16 %v296
    %v1265 = vunpack.c.l.b16 %v297
    %v1266 = vunpack.c.h.b16 %v297
    %v1267 = vunpack.c.l.b16 %v298
    %v1268 = vunpack.c.h.b16 %v298
    %v1269 = vunpack.c.l.b16 %v299
    %v1270 = vunpack.c.h.b16 %v299
    %v1271 = vunpack.c.l.b16 %v300
    %v1272 = vunpack.c.l.b16 %v301
    %v1273 = vunpack.c.h.b16 %v301
    %v1274 = vunpack.c.l.b16 %v302
    %v1275 = vunpack.c.h.b16 %v302
    %v1276 = vunpack.c.l.b16 %v303
    %v1277 = vunpack.c.h.b16 %v303
    %v1278 = vunpack.c.l.b16 %v304
    %v1279 = vunpack.c.l.b16 %v305
    %v1280 = vunpack.c.h.b16 %v305
    %v1281 = vunpack.c.l.b16 %v306
    %v1282 = vunpack.c.h.b16 %v306
    %v1283 = vunpack.c.l.b16 %v307
    %v1284 = vunpack.c.h.b16 %v307
    %v1285 = vunpack.c.l.b16 %v308
    %v1286 = vunpack.c.l.b16 %v309
    %v1287 = vunpack.c.h.b16 %v309
    %v1288 = vunpack.c.l.b16 %v310
    %v1289 = vunpack.c.h.b16 %v310
    %v1290 = vunpack.c.l.b16 %v311
    %v1291 = vunpack.c.h.b16 %v311
    %v1292 = vunpack.c.l.b16 %v312
    %v1293 = vunpack.c.l.b16 %v313
    %v1294 = vunpack.c.h.b16 %v313
    %v1295 = vunpack.c.l.b16 %v314
    %v1296 = vunpack.c.h.b16 %v314
    %v1297 = vunpack.c.l.b16 %v315
    %v1298 = vunpack.c.h.b16 %v315
    %v1299 = vunpack.c.l.b16 %v316
    %v1300 = vunpack.c.l.b16 %v317
    %v1301 = vunpack.c.h.b16 %v317
    %v1302 = vunpack.c.l.b16 %v318
    %v1303 = vunpack.c.h.b16 %v318
    %v1304 = vunpack.c.l.b16 %v319
    %v1305 = vunpack.c.h.b16 %v319
    %v1306 = vunpack.c.l.b16 %v320
    %v1307 = vunpack.c.l.b16 %v321
    %v1308 = vunpack.c.h.b16 %v321
    %v1309 = vunpack.c.l.b16 %v322
    %v1310 = vunpack.c.h.b16 %v322
    %v1311 = vunpack.c.l.b16 %v323
    %v1312 = vunpack.c.h.b16 %v323
    %v1313 = vunpack.c.l.b16 %v324
    %v1314 = vunpack.c.l.b16 %v325
    %v1315 = vunpack.c.h.b16 %v325
    %v1316 = vunpack.c.l.b16 %v326
    %v1317 = vunpack.c.h.b16 %v326
    %v1318 = vunpack.c.l.b16 %v327
    %v1319 = vunpack.c.h.b16 %v327
    %v1320 = vunpack.c.l.b16 %v328
    %v1321 = vunpack.c.l.b16 %v329
    %v1322 = vunpack.c.h.b16 %v329
    %v1323 = vunpack.c.l.b16 %v330
    %v1324 = vunpack.c.h.b16 %v330
    %v1325 = vunpack.c.l.b16 %v331
    %v1326 = vunpack.c.h.b16 %v331
    %v1327 = vunpack.c.l.b16 %v332
    %v1328 = vunpack.c.l.b16 %v333
    %v1329 = vunpack.c.h.b16 %v333
    %v1330 = vunpack.c.l.b16 %v334
    %v1331 = vunpack.c.h.b16 %v334
    %v1332 = vunpack.c.l.b16 %v335
    %v1333 = vunpack.c.h.b16 %v335
    %v1334 = vunpack.c.l.b16 %v336
    %v1335 = vunpack.c.l.b16 %v337
    %v1336 = vunpack.c.h.b16 %v337
    %v1337 = vunpack.c.l.b16 %v338
    %v1338 = vunpack.c.h.b16 %v338
    %v1339 = vunpack.c.l.b16 %v339
    %v1340 = vunpack.c.h.b16 %v339
    %v1341 = vunpack.c.l.b16 %v340
    %v1342 = vunpack.c.l.b16 %v341
    %v1343 = vunpack.c.h.b16 %v341
    %v1344 = vunpack.c.l.b16 %v342
    %v1345 = vunpack.c.h.b16 %v342
    %v1346 = vunpack.c.l.b16 %v343
    %v1347 = vunpack.c.h.b16 %v343
    %v1348 = vunpack.c.l.b16 %v344
    %v1349 = vunpack.c.l.b16 %v345
    %v1350 = vunpack.c.h.b16 %v345
    %v1351 = vunpack.c.l.b16 %v346
    %v1352 = vunpack.c.h.b16 %v346
    %v1353 = vunpack.c.l.b16 %v347
    %v1354 = vunpack.c.h.b16 %v347
    %v1355 = vunpack.c.l.b16 %v348
    %v1356 = vunpack.c.l.b16 %v349
    %v1357 = vunpack.c.h.b16 %v349
    %v1358 = vunpack.c.l.b16 %v350
    %v1359 = vunpack.c.h.b16 %v350
    %v1360 = vunpack.c.l.b16 %v351
    %v1361 = vunpack.c.h.b16 %v351
    %v1362 = vunpack.c.l.b16 %v352
    %v1363 = vunpack.c.l.b16 %v353
    %v1364 = vunpack.c.h.b16 %v353
    %v1365 = vunpack.c.l.b16 %v354
    %v1366 = vunpack.c.h.b16 %v354
    %v1367 = vunpack.c.l.b16 %v355
    %v1368 = vunpack.c.h.b16 %v355
    %v1369 = vunpack.c.l.b16 %v356
    %v1370 = vunpack.c.l.b16 %v357
    %v1371 = vunpack.c.h.b16 %v357
    %v1372 = vunpack.c.l.b16 %v358
    %v1373 = vunpack.c.h.b16 %v358
    %v1374 = vunpack.c.l.b16 %v359
    %v1375 = vunpack.c.h.b16 %v359
    %v1376 = vunpack.c.l.b16 %v360
    %v1377 = vunpack.c.l.b16 %v361
    %v1378 = vunpack.c.h.b16 %v361
    %v1379 = vunpack.c.l.b16 %v362
    %v1380 = vunpack.c.h.b16 %v362
    %v1381 = vunpack.c.l.b16 %v363
    %v1382 = vunpack.c.h.b16 %v363
    %v1383 = vunpack.c.l.b16 %v364
    %v1384 = vunpack.c.l.b16 %v365
    %v1385 = vunpack.c.h.b16 %v365
    %v1386 = vunpack.c.l.b16 %v366
    %v1387 = vunpack.c.h.b16 %v366
    %v1388 = vunpack.c.l.b16 %v367
    %v1389 = vunpack.c.h.b16 %v367
    %v1390 = vunpack.c.l.b16 %v368
    %v1391 = vunpack.c.l.b16 %v369
    %v1392 = vunpack.c.h.b16 %v369
    %v1393 = vunpack.c.l.b16 %v370
    %v1394 = vunpack.c.h.b16 %v370
    %v1395 = vunpack.c.l.b16 %v371
    %v1396 = vunpack.c.h.b16 %v371
    %v1397 = vunpack.c.l.b16 %v372
    %v1398 = vunpack.c.l.b16 %v373
    %v1399 = vunpack.c.h.b16 %v373
    %v1400 = vunpack.c.l.b16 %v374
    %v1401 = vunpack.c.h.b16 %v374
    %v1402 = vunpack.c.l.b16 %v375
    %v1403 = vunpack.c.h.b16 %v375
    %v1404 = vunpack.c.l.b16 %v376
    %v1405 = vunpack.c.l.b16 %v377
    %v1406 = vunpack.c.h.b16 %v377
    %v1407 = vunpack.c.l.b16 %v378
    %v1408 = vunpack.c.h.b16 %v378
    %v1409 = vunpack.c.l.b16 %v379
    %v1410 = vunpack.c.h.b16 %v379
    %v1411 = vunpack.c.l.b16 %v380
    %v1412 = vunpack.c.l.b16 %v381
    %v1413 = vunpack.c.h.b16 %v381
    %v1414 = vunpack.c.l.b16 %v382
    %v1415 = vunpack.c.h.b16 %v382
    %v1416 = vunpack.c.l.b16 %v383
    %v1417 = vunpack.c.h.b16 %v383
    %v1418 = vunpack.c.l.b16 %v384
    %v1419 = vunpack.c.l.b16 %v385
    %v1420 = vunpack.c.h.b16 %v385
    %v1421 = vunpack.c.l.b16 %v386
    %v1422 = vunpack.c.h.b16 %v386
    %v1423 = vunpack.c.l.b16 %v387
    %v1424 = vunpack.c.h.b16 %v387
    %v1425 = vunpack.c.l.b16 %v388
    %v1426 = vunpack.c.l.b16 %v389
    %v1427 = vunpack.c.h.b16 %v389
    %v1428 = vunpack.c.l.b16 %v390
    %v1429 = vunpack.c.h.b16 %v390
    %v1430 = vunpack.c.l.b16 %v391
    %v1431 = vunpack.c.h.b16 %v391
    %v1432 = vunpack.c.l.b16 %v392
    %v1433 = vunpack.c.l.b16 %v393
    %v1434 = vunpack.c.h.b16 %v393
    %v1435 = vunpack.c.l.b16 %v394
    %v1436 = vunpack.c.h.b16 %v394
    %v1437 = vunpack.c.l.b16 %v395
    %v1438 = vunpack.c.h.b16 %v395
    %v1439 = vunpack.c.l.b16 %v396
    %v1440 = vunpack.c.l.b16 %v397
    %v1441 = vunpack.c.h.b16 %v397
    %v1442 = vunpack.c.l.b16 %v398
    %v1443 = vunpack.c.h.b16 %v398
    %v1444 = vunpack.c.l.b16 %v399
    %v1445 = vunpack.c.h.b16 %v399
    %v1446 = vunpack.c.l.b16 %v400
    %v1447 = vunpack.c.l.b16 %v401
    %v1448 = vunpack.c.h.b16 %v401
    %v1449 = vunpack.c.l.b16 %v402
    %v1450 = vunpack.c.h.b16 %v402
    %v1451 = vunpack.c.l.b16 %v403
    %v1452 = vunpack.c.h.b16 %v403
    %v1453 = vunpack.c.l.b16 %v404
    %v1454 = vunpack.c.l.b16 %v405
    %v1455 = vunpack.c.h.b16 %v405
    %v1456 = vunpack.c.l.b16 %v406
    %v1457 = vunpack.c.h.b16 %v406
    %v1458 = vunpack.c.l.b16 %v407
    %v1459 = vunpack.c.h.b16 %v407
    %v1460 = vunpack.c.l.b16 %v408
    %v1461 = vunpack.c.l.b16 %v409
    %v1462 = vunpack.c.h.b16 %v409
    %v1463 = vunpack.c.l.b16 %v410
    %v1464 = vunpack.c.h.b16 %v410
    %v1465 = vunpack.c.l.b16 %v411
    %v1466 = vunpack.c.h.b16 %v411
    %v1467 = vunpack.c.l.b16 %v412
    %v1468 = vunpack.c.l.b16 %v413
    %v1469 = vunpack.c.h.b16 %v413
    %v1470 = vunpack.c.l.b16 %v414
    %v1471 = vunpack.c.h.b16 %v414
    %v1472 = vunpack.c.l.b16 %v415
    %v1473 = vunpack.c.h.b16 %v415
    %v1474 = vunpack.c.l.b16 %v416
    %v1475 = vunpack.c.l.b16 %v417
    %v1476 = vunpack.c.h.b16 %v417
    %v1477 = vunpack.c.l.b16 %v418
    %v1478 = vunpack.c.h.b16 %v418
    %v1479 = vunpack.c.l.b16 %v419
    %v1480 = vunpack.c.h.b16 %v419
    %v1481 = vunpack.c.l.b16 %v420
    %v1482 = vunpack.c.l.b16 %v421
    %v1483 = vunpack.c.h.b16 %v421
    %v1484 = vunpack.c.l.b16 %v422
    %v1485 = vunpack.c.h.b16 %v422
    %v1486 = vunpack.c.l.b16 %v423
    %v1487 = vunpack.c.h.b16 %v423
    %v1488 = vunpack.c.l.b16 %v424
    %v1489 = vunpack.c.l.b16 %v425
    %v1490 = vunpack.c.h.b16 %v425
    %v1491 = vunpack.c.l.b16 %v426
    %v1492 = vunpack.c.h.b16 %v426
    %v1493 = vunpack.c.l.b16 %v427
    %v1494 = vunpack.c.h.b16 %v427
    %v1495 = vunpack.c.l.b16 %v428
    %v1496 = vunpack.c.l.b16 %v429
    %v1497 = vunpack.c.h.b16 %v429
    %v1498 = vunpack.c.l.b16 %v430
    %v1499 = vunpack.c.h.b16 %v430
    %v1500 = vunpack.c.l.b16 %v431
    %v1501 = vunpack.c.h.b16 %v431
    %v1502 = vunpack.c.l.b16 %v432
    %v1503 = vunpack.c.l.b16 %v433
    %v1504 = vunpack.c.h.b16 %v433
    %v1505 = vunpack.c.l.b16 %v434
    %v1506 = vunpack.c.h.b16 %v434
    %v1507 = vunpack.c.l.b16 %v435
    %v1508 = vunpack.c.h.b16 %v435
    %v1509 = vunpack.c.l.b16 %v436
    %v1510 = vunpack.c.l.b16 %v437
    %v1511 = vunpack.c.h.b16 %v437
    %v1512 = vunpack.c.l.b16 %v438
    %v1513 = vunpack.c.h.b16 %v438
    %v1514 = vunpack.c.l.b16 %v439
    %v1515 = vunpack.c.h.b16 %v439
    %v1516 = vunpack.c.l.b16 %v440
    %v1517 = vunpack.c.l.b16 %v441
    %v1518 = vunpack.c.h.b16 %v441
    %v1519 = vunpack.c.l.b16 %v442
    %v1520 = vunpack.c.h.b16 %v442
    %v1521 = vunpack.c.l.b16 %v443
    %v1522 = vunpack.c.h.b16 %v443
    %v1523 = vunpack.c.l.b16 %v444
    %v1524 = vunpack.c.l.b16 %v445
    %v1525 = vunpack.c.h.b16 %v445
    %v1526 = vunpack.c.l.b16 %v446
    %v1527 = vunpack.c.h.b16 %v446
    %v1528 = vunpack.c.l.b16 %v447
    %v1529 = vunpack.c.h.b16 %v447
    %v1530 = vunpack.c.l.b16 %v448
    %v1531 = vunpack.c.l.b16 %v449
    %v1532 = vunpack.c.h.b16 %v449
    %v1533 = vunpack.c.l.b16 %v450
    %v1534 = vunpack.c.h.b16 %v450
    %v1535 = vunpack.c.l.b16 %v451
    %v1536 = vunpack.c.h.b16 %v451
    %v1537 = vunpack.c.l.b16 %v452
    %v1538 = vunpack.c.l.b16 %v453
    %v1539 = vunpack.c.h.b16 %v453
    %v1540 = vunpack.c.l.b16 %v454
    %v1541 = vunpack.c.h.b16 %v454
    %v1542 = vunpack.c.l.b16 %v455
    %v1543 = vunpack.c.h.b16 %v455
    %v1544 = vunpack.c.l.b16 %v456
    %v1545 = vunpack.c.l.b16 %v457
    %v1546 = vunpack.c.h.b16 %v457
    %v1547 = vunpack.c.l.b16 %v458
    %v1548 = vunpack.c.h.b16 %v458
    %v1549 = vunpack.c.l.b16 %v459
    %v1550 = vunpack.c.h.b16 %v459
    %v1551 = vunpack.c.l.b16 %v460
    %v1552 = vunpack.c.l.b16 %v461
    %v1553 = vunpack.c.h.b16 %v461
    %v1554 = vunpack.c.l.b16 %v462
    %v1555 = vunpack.c.h.b16 %v462
    %v1556 = vunpack.c.l.b16 %v463
    %v1557 = vunpack.c.h.b16 %v463
    %v1558 = vunpack.c.l.b16 %v464
    %v1559 = vunpack.c.l.b16 %v465
    %v1560 = vunpack.c.h.b16 %v465
    %v1561 = vunpack.c.l.b16 %v466
    %v1562 = vunpack.c.h.b16 %v466
    %v1563 = vunpack.c.l.b16 %v467
    %v1564 = vunpack.c.h.b16 %v467
    %v1565 = vunpack.c.l.b16 %v468
    %v1566 = vunpack.c.l.b16 %v469
    %v1567 = vunpack.c.h.b16 %v469
    %v1568 = vunpack.c.l.b16 %v470
    %v1569 = vunpack.c.h.b16 %v470
    %v1570 = vunpack.c.l.b16 %v471
    %v1571 = vunpack.c.h.b16 %v471
    %v1572 = vunpack.c.l.b16 %v472
    %v1573 = vunpack.c.l.b16 %v473
    %v1574 = vunpack.c.h.b16 %v473
    %v1575 = vunpack.c.l.b16 %v474
    %v1576 = vunpack.c.h.b16 %v474
    %v1577 = vunpack.c.l.b16 %v475
    %v1578 = vunpack.c.h.b16 %v475
    %v1579 = vunpack.c.l.b16 %v476
    %v1580 = vunpack.c.l.b16 %v477
    %v1581 = vunpack.c.h.b16 %v477
    %v1582 = vunpack.c.l.b16 %v478
    %v1583 = vunpack.c.h.b16 %v478
    %v1584 = vunpack.c.l.b16 %v479
    %v1585 = vunpack.c.h.b16 %v479
    %v1586 = vunpack.c.l.b16 %v480
    %v1587 = vunpack.c.l.b16 %v481
    %v1588 = vunpack.c.h.b16 %v481
    %v1589 = vunpack.c.l.b16 %v482
    %v1590 = vunpack.c.h.b16 %v482
    %v1591 = vunpack.c.l.b16 %v483
    %v1592 = vunpack.c.h.b16 %v483
    %v1593 = vunpack.c.l.b16 %v484
    %v1594 = vunpack.c.l.b16 %v485
    %v1595 = vunpack.c.h.b16 %v485
    %v1596 = vunpack.c.l.b16 %v486
    %v1597 = vunpack.c.h.b16 %v486
    %v1598 = vunpack.c.l.b16 %v487
    %v1599 = vunpack.c.h.b16 %v487
    %v1600 = vunpack.c.l.b16 %v488
    %v1601 = vunpack.c.l.b16 %v489
    %v1602 = vunpack.c.h.b16 %v489
    %v1603 = vunpack.c.l.b16 %v490
    %v1604 = vunpack.c.h.b16 %v490
    %v1605 = vunpack.c.l.b16 %v491
    %v1606 = vunpack.c.h.b16 %v491
    %v1607 = vunpack.c.l.b16 %v492
    %v1608 = vpack.c.b16 %v929, %v922
    %v1609 = vpack.c.b16 %v930, %v923
    %v1610 = vpack.c.b16 %v931, %v924
    %v1611 = vpack.c.b16 %v932, %v925
    %v1612 = vpack.c.b16 %v933, %v926
    %v1613 = vpack.c.b16 %v934, %v927
    %v1614 = vpack.c.b16 %v935, %v928
    %v1615 = vpack.c.b16 %v943, %v936
    %v1616 = vpack.c.b16 %v944, %v937
    %v1617 = vpack.c.b16 %v945, %v938
    %v1618 = vpack.c.b16 %v946, %v939
    %v1619 = vpack.c.b16 %v947, %v940
    %v1620 = vpack.c.b16 %v948, %v941
    %v1621 = vpack.c.b16 %v949, %v942
    %v1622 = vpack.c.b16 %v957, %v950
    %v1623 = vpack.c.b16 %v958, %v951
    %v1624 = vpack.c.b16 %v959, %v952
    %v1625 = vpack.c.b16 %v960, %v953
    %v1626 = vpack.c.b16 %v961, %v954
    %v1627 = vpack.c.b16 %v962, %v955
    %v1628 = vpack.c.b16 %v963, %v956
    %v1629 = vpack.c.b16 %v971, %v964
    %v1630 = vpack.c.b16 %v972, %v965
    %v1631 = vpack.c.b16 %v973, %v966
    %v1632 = vpack.c.b16 %v974, %v967
    %v1633 = vpack.c.b16 %v975, %v968
    %v1634 = vpack.c.b16 %v976, %v969
    %v1635 = vpack.c.b16 %v977, %v970
    %v1636 = vpack.c.b16 %v985, %v978
    %v1637 = vpack.c.b16 %v986, %v979
    %v1638 = vpack.c.b16 %v987, %v980
    %v1639 = vpack.c.b16 %v988, %v981
    %v1640 = vpack.c.b16 %v989, %v982
    %v1641 = vpack.c.b16 %v990, %v983
    %v1642 = vpack.c.b16 %v991, %v984
    %v1643 = vpack.c.b16 %v999, %v992
    %v1644 = vpack.c.b16 %v1000, %v993
    %v1645 = vpack.c.b16 %v1001, %v994
    %v1646 = vpack.c.b16 %v1002, %v995
    %v1647 = vpack.c.b16 %v1003, %v996
    %v1648 = vpack.c.b16 %v1004, %v997
    %v1649 = vpack.c.b16 %v1005, %v998
    %v1650 = vpack.c.b16 %v1013, %v1006
    %v1651 = vpack.c.b16 %v1014, %v1007
    %v1652 = vpack.c.b16 %v1015, %v1008
    %v1653 = vpack.c.b16 %v1016, %v1009
    %v1654 = vpack.c.b16 %v1017, %v1010
    %v1655 = vpack.c.b16 %v1018, %v1011
    %v1656 = vpack.c.b16 %v1019, %v1012
    %v1657 = vpack.c.b16 %v1027, %v1020
    %v1658 = vpack.c.b16 %v1028, %v1021
    %v1659 = vpack.c.b16 %v1029, %v1022
    %v1660 = vpack.c.b16 %v1030, %v1023
    %v1661 = vpack.c.b16 %v1031, %v1024
    %v1662 = vpack.c.b16 %v1032, %v1025
    %v1663 = vpack.c.b16 %v1033, %v1026
    %v1664 = vpack.c.b16 %v1041, %v1034
    %v1665 = vpack.c.b16 %v1042, %v1035
    %v1666 = vpack.c.b16 %v1043, %v1036
    %v1667 = vpack.c.b16 %v1044, %v1037
    %v1668 = vpack.c.b16 %v1045, %v1038
    %v1669 = vpack.c.b16 %v1046, %v1039
    %v1670 = vpack.c.b16 %v1047, %v1040
    %v1671 = vpack.c.b16 %v1055, %v1048
    %v1672 = vpack.c.b16 %v1056, %v1049
    %v1673 = vpack.c.b16 %v1057, %v1050
    %v1674 = vpack.c.b16 %v1058, %v1051
    %v1675 = vpack.c.b16 %v1059, %v1052
    %v1676 = vpack.c.b16 %v1060, %v1053
    %v1677 = vpack.c.b16 %v1061, %v1054
    %v1678 = vpack.c.b16 %v1069, %v1062
    %v1679 = vpack.c.b16 %v1070, %v1063
    %v1680 = vpack.c.b16 %v1071, %v1064
    %v1681 = vpack.c.b16 %v1072, %v1065
    %v1682 = vpack.c.b16 %v1073, %v1066
    %v1683 = vpack.c.b16 %v1074, %v1067
    %v1684 = vpack.c.b16 %v1075, %v1068
    %v1685 = vpack.c.b16 %v1083, %v1076
    %v1686 = vpack.c.b16 %v1084, %v1077
    %v1687 = vpack.c.b16 %v1085, %v1078
    %v1688 = vpack.c.b16 %v1086, %v1079
    %v1689 = vpack.c.b16 %v1087, %v1080
    %v1690 = vpack.c.b16 %v1088, %v1081
    %v1691 = vpack.c.b16 %v1089, %v1082
    %v1692 = vpack.c.b16 %v1097, %v1090
    %v1693 = vpack.c.b16 %v1098, %v1091
    %v1694 = vpack.c.b16 %v1099, %v1092
    %v1695 = vpack.c.b16 %v1100, %v1093
    %v1696 = vpack.c.b16 %v1101, %v1094
    %v1697 = vpack.c.b16 %v1102, %v1095
    %v1698 = vpack.c.b16 %v1103, %v1096
    %v1699 = vpack.c.b16 %v1111, %v1104
    %v1700 = vpack.c.b16 %v1112, %v1105
    %v1701 = vpack.c.b16 %v1113, %v1106
    %v1702 = vpack.c.b16 %v1114, %v1107
    %v1703 = vpack.c.b16 %v1115, %v1108
    %v1704 = vpack.c.b16 %v1116, %v1109
    %v1705 = vpack.c.b16 %v1117, %v1110
    %v1706 = vpack.c.b16 %v1125, %v1118
    %v1707 = vpack.c.b16 %v1126, %v1119
    %v1708 = vpack.c.b16 %v1127, %v1120
    %v1709 = vpack.c.b16 %v1128, %v1121
    %v1710 = vpack.c.b16 %v1129, %v1122
    %v1711 = vpack.c.b16 %v1130, %v1123
    %v1712 = vpack.c.b16 %v1131, %v1124
    %v1713 = vpack.c.b16 %v1139, %v1132
    %v1714 = vpack.c.b16 %v1140, %v1133
    %v1715 = vpack.c.b16 %v1141, %v1134
    %v1716 = vpack.c.b16 %v1142, %v1135
    %v1717 = vpack.c.b16 %v1143, %v1136
    %v1718 = vpack.c.b16 %v1144, %v1137
    %v1719 = vpack.c.b16 %v1145, %v1138
    %v1720 = vpack.c.b16 %v1153, %v1146
    %v1721 = vpack.c.b16 %v1154, %v1147
    %v1722 = vpack.c.b16 %v1155, %v1148
    %v1723 = vpack.c.b16 %v1156, %v1149
    %v1724 = vpack.c.b16 %v1157, %v1150
    %v1725 = vpack.c.b16 %v1158, %v1151
    %v1726 = vpack.c.b16 %v1159, %v1152
    %v1727 = vpack.c.b16 %v1167, %v1160
    %v1728 = vpack.c.b16 %v1168, %v1161
    %v1729 = vpack.c.b16 %v1169, %v1162
    %v1730 = vpack.c.b16 %v1170, %v1163
    %v1731 = vpack.c.b16 %v1171, %v1164
    %v1732 = vpack.c.b16 %v1172, %v1165
    %v1733 = vpack.c.b16 %v1173, %v1166
    %v1734 = vpack.c.b16 %v1181, %v1174
    %v1735 = vpack.c.b16 %v1182, %v1175
    %v1736 = vpack.c.b16 %v1183, %v1176
    %v1737 = vpack.c.b16 %v1184, %v1177
    %v1738 = vpack.c.b16 %v1185, %v1178
    %v1739 = vpack.c.b16 %v1186, %v1179
    %v1740 = vpack.c.b16 %v1187, %v1180
    %v1741 = vpack.c.b16 %v1195, %v1188
    %v1742 = vpack.c.b16 %v1196, %v1189
    %v1743 = vpack.c.b16 %v1197, %v1190
    %v1744 = vpack.c.b16 %v1198, %v1191
    %v1745 = vpack.c.b16 %v1199, %v1192
    %v1746 = vpack.c.b16 %v1200, %v1193
    %v1747 = vpack.c.b16 %v1201, %v1194
    %v1748 = vpack.c.b16 %v1209, %v1202
    %v1749 = vpack.c.b16 %v1210, %v1203
    %v1750 = vpack.c.b16 %v1211, %v1204
    %v1751 = vpack.c.b16 %v1212, %v1205
    %v1752 = vpack.c.b16 %v1213, %v1206
    %v1753 = vpack.c.b16 %v1214, %v1207
    %v1754 = vpack.c.b16 %v1215, %v1208
    %v1755 = vpack.c.b16 %v1223, %v1216
    %v1756 = vpack.c.b16 %v1224, %v1217
    %v1757 = vpack.c.b16 %v1225, %v1218
    %v1758 = vpack.c.b16 %v1226, %v1219
    %v1759 = vpack.c.b16 %v1227, %v1220
    %v1760 = vpack.c.b16 %v1228, %v1221
    %v1761 = vpack.c.b16 %v1229, %v1222
    %v1762 = vpack.c.b16 %v1237, %v1230
    %v1763 = vpack.c.b16 %v1238, %v1231
    %v1764 = vpack.c.b16 %v1239, %v1232
    %v1765 = vpack.c.b16 %v1240, %v1233
    %v1766 = vpack.c.b16 %v1241, %v1234
    %v1767 = vpack.c.b16 %v1242, %v1235
    %v1768 = vpack.c.b16 %v1243, %v1236
    %v1769 = vpack.c.b16 %v1251, %v1244
    %v1770 = vpack.c.b16 %v1252, %v1245
    %v1771 = vpack.c.b16 %v1253, %v1246
    %v1772 = vpack.c.b16 %v1254, %v1247
    %v1773 = vpack.c.b16 %v1255, %v1248
    %v1774 = vpack.c.b16 %v1256, %v1249
    %v1775 = vpack.c.b16 %v1257, %v1250
    %v1776 = vpack.c.b16 %v1265, %v1258
    %v1777 = vpack.c.b16 %v1266, %v1259
    %v1778 = vpack.c.b16 %v1267, %v1260
    %v1779 = vpack.c.b16 %v1268, %v1261
    %v1780 = vpack.c.b16 %v1269, %v1262
    %v1781 = vpack.c.b16 %v1270, %v1263
    %v1782 = vpack.c.b16 %v1271, %v1264
    %v1783 = vpack.c.b16 %v1279, %v1272
    %v1784 = vpack.c.b16 %v1280, %v1273
    %v1785 = vpack.c.b16 %v1281, %v1274
    %v1786 = vpack.c.b16 %v1282, %v1275
    %v1787 = vpack.c.b16 %v1283, %v1276
    %v1788 = vpack.c.b16 %v1284, %v1277
    %v1789 = vpack.c.b16 %v1285, %v1278
    %v1790 = vpack.c.b16 %v1293, %v1286
    %v1791 = vpack.c.b16 %v1294, %v1287
    %v1792 = vpack.c.b16 %v1295, %v1288
    %v1793 = vpack.c.b16 %v1296, %v1289
    %v1794 = vpack.c.b16 %v1297, %v1290
    %v1795 = vpack.c.b16 %v1298, %v1291
    %v1796 = vpack.c.b16 %v1299, %v1292
    %v1797 = vpack.c.b16 %v1307, %v1300
    %v1798 = vpack.c.b16 %v1308, %v1301
    %v1799 = vpack.c.b16 %v1309, %v1302
    %v1800 = vpack.c.b16 %v1310, %v1303
    %v1801 = vpack.c.b16 %v1311, %v1304
    %v1802 = vpack.c.b16 %v1312, %v1305
    %v1803 = vpack.c.b16 %v1313, %v1306
    %v1804 = vpack.c.b16 %v1321, %v1314
    %v1805 = vpack.c.b16 %v1322, %v1315
    %v1806 = vpack.c.b16 %v1323, %v1316
    %v1807 = vpack.c.b16 %v1324, %v1317
    %v1808 = vpack.c.b16 %v1325, %v1318
    %v1809 = vpack.c.b16 %v1326, %v1319
    %v1810 = vpack.c.b16 %v1327, %v1320
    %v1811 = vpack.c.b16 %v1335, %v1328
    %v1812 = vpack.c.b16 %v1336, %v1329
    %v1813 = vpack.c.b16 %v1337, %v1330
    %v1814 = vpack.c.b16 %v1338, %v1331
    %v1815 = vpack.c.b16 %v1339, %v1332
    %v1816 = vpack.c.b16 %v1340, %v1333
    %v1817 = vpack.c.b16 %v1341, %v1334
    %v1818 = vpack.c.b16 %v1349, %v1342
    %v1819 = vpack.c.b16 %v1350, %v1343
    %v1820 = vpack.c.b16 %v1351, %v1344
    %v1821 = vpack.c.b16 %v1352, %v1345
    %v1822 = vpack.c.b16 %v1353, %v1346
    %v1823 = vpack.c.b16 %v1354, %v1347
    %v1824 = vpack.c.b16 %v1355, %v1348
    %v1825 = vpack.c.b16 %v1363, %v1356
    %v1826 = vpack.c.b16 %v1364, %v1357
    %v1827 = vpack.c.b16 %v1365, %v1358
    %v1828 = vpack.c.b16 %v1366, %v1359
    %v1829 = vpack.c.b16 %v1367, %v1360
    %v1830 = vpack.c.b16 %v1368, %v1361
    %v1831 = vpack.c.b16 %v1369, %v1362
    %v1832 = vpack.c.b16 %v1377, %v1370
    %v1833 = vpack.c.b16 %v1378, %v1371
    %v1834 = vpack.c.b16 %v1379, %v1372
    %v1835 = vpack.c.b16 %v1380, %v1373
    %v1836 = vpack.c.b16 %v1381, %v1374
    %v1837 = vpack.c.b16 %v1382, %v1375
    %v1838 = vpack.c.b16 %v1383, %v1376
    %v1839 = vpack.c.b16 %v1391, %v1384
    %v1840 = vpack.c.b16 %v1392, %v1385
    %v1841 = vpack.c.b16 %v1393, %v1386
    %v1842 = vpack.c.b16 %v1394, %v1387
    %v1843 = vpack.c.b16 %v1395, %v1388
    %v1844 = vpack.c.b16 %v1396, %v1389
    %v1845 = vpack.c.b16 %v1397, %v1390
    %v1846 = vpack.c.b16 %v1405, %v1398
    %v1847 = vpack.c.b16 %v1406, %v1399
    %v1848 = vpack.c.b16 %v1407, %v1400
    %v1849 = vpack.c.b16 %v1408, %v1401
    %v1850 = vpack.c.b16 %v1409, %v1402
    %v1851 = vpack.c.b16 %v1410, %v1403
    %v1852 = vpack.c.b16 %v1411, %v1404
    %v1853 = vpack.c.b16 %v1419, %v1412
    %v1854 = vpack.c.b16 %v1420, %v1413
    %v1855 = vpack.c.b16 %v1421, %v1414
    %v1856 = vpack.c.b16 %v1422, %v1415
    %v1857 = vpack.c.b16 %v1423, %v1416
    %v1858 = vpack.c.b16 %v1424, %v1417
    %v1859 = vpack.c.b16 %v1425, %v1418
    %v1860 = vpack.c.b16 %v1433, %v1426
    %v1861 = vpack.c.b16 %v1434, %v1427
    %v1862 = vpack.c.b16 %v1435, %v1428
    %v1863 = vpack.c.b16 %v1436, %v1429
    %v1864 = vpack.c.b16 %v1437, %v1430
    %v1865 = vpack.c.b16 %v1438, %v1431
    %v1866 = vpack.c.b16 %v1439, %v1432
    %v1867 = vpack.c.b16 %v1447, %v1440
    %v1868 = vpack.c.b16 %v1448, %v1441
    %v1869 = vpack.c.b16 %v1449, %v1442
    %v1870 = vpack.c.b16 %v1450, %v1443
    %v1871 = vpack.c.b16 %v1451, %v1444
    %v1872 = vpack.c.b16 %v1452, %v1445
    %v1873 = vpack.c.b16 %v1453, %v1446
    %v1874 = vpack.c.b16 %v1461, %v1454
    %v1875 = vpack.c.b16 %v1462, %v1455
    %v1876 = vpack.c.b16 %v1463, %v1456
    %v1877 = vpack.c.b16 %v1464, %v1457
    %v1878 = vpack.c.b16 %v1465, %v1458
    %v1879 = vpack.c.b16 %v1466, %v1459
    %v1880 = vpack.c.b16 %v1467, %v1460
    %v1881 = vpack.c.b16 %v1475, %v1468
    %v1882 = vpack.c.b16 %v1476, %v1469
    %v1883 = vpack.c.b16 %v1477, %v1470
    %v1884 = vpack.c.b16 %v1478, %v1471
    %v1885 = vpack.c.b16 %v1479, %v1472
    %v1886 = vpack.c.b16 %v1480, %v1473
    %v1887 = vpack.c.b16 %v1481, %v1474
    %v1888 = vpack.c.b16 %v1489, %v1482
    %v1889 = vpack.c.b16 %v1490, %v1483
    %v1890 = vpack.c.b16 %v1491, %v1484
    %v1891 = vpack.c.b16 %v1492, %v1485
    %v1892 = vpack.c.b16 %v1493, %v1486
    %v1893 = vpack.c.b16 %v1494, %v1487
    %v1894 = vpack.c.b16 %v1495, %v1488
    %v1895 = vpack.c.b16 %v1503, %v1496
    %v1896 = vpack.c.b16 %v1504, %v1497
    %v1897 = vpack.c.b16 %v1505, %v1498
    %v1898 = vpack.c.b16 %v1506, %v1499
    %v1899 = vpack.c.b16 %v1507, %v1500
    %v1900 = vpack.c.b16 %v1508, %v1501
    %v1901 = vpack.c.b16 %v1509, %v1502
    %v1902 = vpack.c.b16 %v1517, %v1510
    %v1903 = vpack.c.b16 %v1518, %v1511
    %v1904 = vpack.c.b16 %v1519, %v1512
    %v1905 = vpack.c.b16 %v1520, %v1513
    %v1906 = vpack.c.b16 %v1521, %v1514
    %v1907 = vpack.c.b16 %v1522, %v1515
    %v1908 = vpack.c.b16 %v1523, %v1516
    %v1909 = vpack.c.b16 %v1531, %v1524
    %v1910 = vpack.c.b16 %v1532, %v1525
    %v1911 = vpack.c.b16 %v1533, %v1526
    %v1912 = vpack.c.b16 %v1534, %v1527
    %v1913 = vpack.c.b16 %v1535, %v1528
    %v1914 = vpack.c.b16 %v1536, %v1529
    %v1915 = vpack.c.b16 %v1537, %v1530
    %v1916 = vpack.c.b16 %v1545, %v1538
    %v1917 = vpack.c.b16 %v1546, %v1539
    %v1918 = vpack.c.b16 %v1547, %v1540
    %v1919 = vpack.c.b16 %v1548, %v1541
    %v1920 = vpack.c.b16 %v1549, %v1542
    %v1921 = vpack.c.b16 %v1550, %v1543
    %v1922 = vpack.c.b16 %v1551, %v1544
    %v1923 = vpack.c.b16 %v1559, %v1552
    %v1924 = vpack.c.b16 %v1560, %v1553
    %v1925 = vpack.c.b16 %v1561, %v1554
    %v1926 = vpack.c.b16 %v1562, %v1555
    %v1927 = vpack.c.b16 %v1563, %v1556
    %v1928 = vpack.c.b16 %v1564, %v1557
    %v1929 = vpack.c.b16 %v1565, %v1558
    %v1930 = vpack.c.b16 %v1573, %v1566
    %v1931 = vpack.c.b16 %v1574, %v1567
    %v1932 = vpack.c.b16 %v1575, %v1568
    %v1933 = vpack.c.b16 %v1576, %v1569
    %v1934 = vpack.c.b16 %v1577, %v1570
    %v1935 = vpack.c.b16 %v1578, %v1571
    %v1936 = vpack.c.b16 %v1579, %v1572
    %v1937 = vpack.c.b16 %v1587, %v1580
    %v1938 = vpack.c.b16 %v1588, %v1581
    %v1939 = vpack.c.b16 %v1589, %v1582
    %v1940 = vpack.c.b16 %v1590, %v1583
    %v1941 = vpack.c.b16 %v1591, %v1584
    %v1942 = vpack.c.b16 %v1592, %v1585
    %v1943 = vpack.c.b16 %v1593, %v1586
    %v1944 = vpack.c.b16 %v1601, %v1594
    %v1945 = vpack.c.b16 %v1602, %v1595
    %v1946 = vpack.c.b16 %v1603, %v1596
    %v1947 = vpack.c.b16 %v1604, %v1597
    %v1948 = vpack.c.b16 %v1605, %v1598
    %v1949 = vpack.c.b16 %v1606, %v1599
    %v1950 = vpack.c.b16 %v1607, %v1600
    %vm2294 = vcmask 130048
    %v2296 = vsel %vm2294, %v100, 0
    %2298 = vmatprep.subr.bf16.mxu0 %v1658
    %2299 = vmatpush1.bf16.msra.mxu0 %v1657
    %2300 = vmatprep.subr.bf16.mxu0 %v1651
    %2301 = vmatpush1.bf16.msra.mxu0 %v1650
    %2302 = vmatprep.subr.bf16.mxu0 %v1644
    %2303 = vmatpush1.bf16.msra.mxu0 %v1643
    %2304 = vmatprep.subr.bf16.mxu0 %v1637
    %2305 = vmatpush1.bf16.msra.mxu0 %v1636
    %2306 = vmatprep.subr.bf16.mxu0 %v1630
    %2307 = vmatpush1.bf16.msra.mxu0 %v1629
    %2308 = vmatprep.subr.bf16.mxu0 %v1623
    %2309 = vmatpush1.bf16.msra.mxu0 %v1622
    %2310 = vmatprep.subr.bf16.mxu0 %v1616
    %2311 = vmatpush1.bf16.msra.mxu0 %v1615
    %2312 = vmatprep.subr.bf16.mxu0 %v1609
    %2313 = vmatpush1.bf16.msra.mxu0 %v1608
    %2314 = vmatprep.subr.bf16.mxu0 %v1714
    %2315 = vmatpush2.bf16.msra.mxu0 %v1713
    %2316 = vmatprep.subr.bf16.mxu0 %v1707
    %2317 = vmatpush2.bf16.msra.mxu0 %v1706
    %2318 = vmatprep.subr.bf16.mxu0 %v1700
    %2319 = vmatpush2.bf16.msra.mxu0 %v1699
    %2320 = vmatprep.subr.bf16.mxu0 %v1693
    %2321 = vmatpush2.bf16.msra.mxu0 %v1692
    %2322 = vmatprep.subr.bf16.mxu0 %v1686
    %2323 = vmatpush2.bf16.msra.mxu0 %v1685
    %2324 = vmatprep.subr.bf16.mxu0 %v1679
    %2325 = vmatpush2.bf16.msra.mxu0 %v1678
    %2326 = vmatprep.subr.bf16.mxu0 %v1672
    %2327 = vmatpush2.bf16.msra.mxu0 %v1671
    %2328 = vmatprep.subr.bf16.mxu0 %v1665
    %2329 = vmatpush2.bf16.msra.mxu0 %v1664
    %2330 = vmatprep.mubr.bf16.mxu0 %v95
    %2331 = vmatmul.mubr.bf16.gmra.mxu0 %v94
    %v2332 = vpop.f32.mrf.mxu0
    %v2333 = vadd.f32 %v498, %v2332
    %v2334 = vpop.f32.mrf.mxu0
    %v2335 = vadd.f32 %v502, %v2334
    %v2336 = vpop.f32.mrf.mxu0
    %v2337 = vpop.f32.mrf.mxu0
    %2338 = vdwg.mxu0
    %2339 = vmatprep.subr.bf16.mxu0 %v1770
    %2340 = vmatpush1.bf16.msra.mxu0 %v1769
    %2341 = vmatprep.subr.bf16.mxu0 %v1763
    %2342 = vmatpush1.bf16.msra.mxu0 %v1762
    %2343 = vmatprep.subr.bf16.mxu0 %v1756
    %2344 = vmatpush1.bf16.msra.mxu0 %v1755
    %2345 = vmatprep.subr.bf16.mxu0 %v1749
    %2346 = vmatpush1.bf16.msra.mxu0 %v1748
    %2347 = vmatprep.subr.bf16.mxu0 %v1742
    %2348 = vmatpush1.bf16.msra.mxu0 %v1741
    %2349 = vmatprep.subr.bf16.mxu0 %v1735
    %2350 = vmatpush1.bf16.msra.mxu0 %v1734
    %2351 = vmatprep.subr.bf16.mxu0 %v1728
    %2352 = vmatpush1.bf16.msra.mxu0 %v1727
    %2353 = vmatprep.subr.bf16.mxu0 %v1721
    %2354 = vmatpush1.bf16.msra.mxu0 %v1720
    %2355 = vmatprep.subr.bf16.mxu0 %v1826
    %2356 = vmatpush2.bf16.msra.mxu0 %v1825
    %2357 = vmatprep.subr.bf16.mxu0 %v1819
    %2358 = vmatpush2.bf16.msra.mxu0 %v1818
    %2359 = vmatprep.subr.bf16.mxu0 %v1812
    %2360 = vmatpush2.bf16.msra.mxu0 %v1811
    %2361 = vmatprep.subr.bf16.mxu0 %v1805
    %2362 = vmatpush2.bf16.msra.mxu0 %v1804
    %2363 = vmatprep.subr.bf16.mxu0 %v1798
    %2364 = vmatpush2.bf16.msra.mxu0 %v1797
    %2365 = vmatprep.subr.bf16.mxu0 %v1791
    %2366 = vmatpush2.bf16.msra.mxu0 %v1790
    %2367 = vmatprep.subr.bf16.mxu0 %v1784
    %2368 = vmatpush2.bf16.msra.mxu0 %v1783
    %2369 = vmatprep.subr.bf16.mxu0 %v1777
    %2370 = vmatpush2.bf16.msra.mxu0 %v1776
    %2371 = vmatprep.mubr.bf16.mxu0 %v97
    %2372 = vmatmul.mubr.bf16.gmra.mxu0 %v96
    %v2373 = vpop.f32.mrf.mxu0
    %v2374 = vadd.f32 %v2333, %v2373
    %v2375 = vpop.f32.mrf.mxu0
    %v2376 = vadd.f32 %v2335, %v2375
    %v2377 = vpop.f32.mrf.mxu0
    %v2378 = vpop.f32.mrf.mxu0
    %2379 = vdwg.mxu0
    %2380 = vmatprep.subr.bf16.mxu0 %v1882
    %2381 = vmatpush1.bf16.msra.mxu0 %v1881
    %2382 = vmatprep.subr.bf16.mxu0 %v1875
    %2383 = vmatpush1.bf16.msra.mxu0 %v1874
    %2384 = vmatprep.subr.bf16.mxu0 %v1868
    %2385 = vmatpush1.bf16.msra.mxu0 %v1867
    %2386 = vmatprep.subr.bf16.mxu0 %v1861
    %2387 = vmatpush1.bf16.msra.mxu0 %v1860
    %2388 = vmatprep.subr.bf16.mxu0 %v1854
    %2389 = vmatpush1.bf16.msra.mxu0 %v1853
    %2390 = vmatprep.subr.bf16.mxu0 %v1847
    %2391 = vmatpush1.bf16.msra.mxu0 %v1846
    %2392 = vmatprep.subr.bf16.mxu0 %v1840
    %2393 = vmatpush1.bf16.msra.mxu0 %v1839
    %2394 = vmatprep.subr.bf16.mxu0 %v1833
    %2395 = vmatpush1.bf16.msra.mxu0 %v1832
    %2396 = vmatprep.subr.bf16.mxu0 %v1938
    %2397 = vmatpush2.bf16.msra.mxu0 %v1937
    %2398 = vmatprep.subr.bf16.mxu0 %v1931
    %2399 = vmatpush2.bf16.msra.mxu0 %v1930
    %2400 = vmatprep.subr.bf16.mxu0 %v1924
    %2401 = vmatpush2.bf16.msra.mxu0 %v1923
    %2402 = vmatprep.subr.bf16.mxu0 %v1917
    %2403 = vmatpush2.bf16.msra.mxu0 %v1916
    %2404 = vmatprep.subr.bf16.mxu0 %v1910
    %2405 = vmatpush2.bf16.msra.mxu0 %v1909
    %2406 = vmatprep.subr.bf16.mxu0 %v1903
    %2407 = vmatpush2.bf16.msra.mxu0 %v1902
    %2408 = vmatprep.subr.bf16.mxu0 %v1896
    %2409 = vmatpush2.bf16.msra.mxu0 %v1895
    %2410 = vmatprep.subr.bf16.mxu0 %v1889
    %2411 = vmatpush2.bf16.msra.mxu0 %v1888
    %2412 = vmatprep.mubr.bf16.mxu0 %v99
    %2413 = vmatmul.mubr.bf16.gmra.mxu0 %v98
    %v2414 = vpop.f32.mrf.mxu0
    %v2415 = vadd.f32 %v2374, %v2414
    %v2416 = vpop.f32.mrf.mxu0
    %v2417 = vadd.f32 %v2376, %v2416
    %v2418 = vpop.f32.mrf.mxu0
    %v2419 = vpop.f32.mrf.mxu0
    %2420 = vdwg.mxu0
    %2421 = vmatprep.subr.bf16.mxu0 0
    %2422 = vmatpush1.bf16.msra.mxu0 0
    %2423 = vmatprep.subr.bf16.mxu0 0
    %2424 = vmatpush1.bf16.msra.mxu0 0
    %2425 = vmatprep.subr.bf16.mxu0 0
    %2426 = vmatpush1.bf16.msra.mxu0 0
    %2427 = vmatprep.subr.bf16.mxu0 0
    %2428 = vmatpush1.bf16.msra.mxu0 0
    %2429 = vmatprep.subr.bf16.mxu0 0
    %2430 = vmatpush1.bf16.msra.mxu0 0
    %2431 = vmatprep.subr.bf16.mxu0 0
    %2432 = vmatpush1.bf16.msra.mxu0 0
    %2433 = vmatprep.subr.bf16.mxu0 0
    %2434 = vmatpush1.bf16.msra.mxu0 0
    %2435 = vmatprep.subr.bf16.mxu0 %v1945
    %2436 = vmatpush1.bf16.msra.mxu0 %v1944
    %2437 = vmatprep.subr.bf16.mxu0 0
    %2438 = vmatpush2.bf16.msra.mxu0 0
    %2439 = vmatprep.subr.bf16.mxu0 0
    %2440 = vmatpush2.bf16.msra.mxu0 0
    %2441 = vmatprep.subr.bf16.mxu0 0
    %2442 = vmatpush2.bf16.msra.mxu0 0
    %2443 = vmatprep.subr.bf16.mxu0 0
    %2444 = vmatpush2.bf16.msra.mxu0 0
    %2445 = vmatprep.subr.bf16.mxu0 0
    %2446 = vmatpush2.bf16.msra.mxu0 0
    %2447 = vmatprep.subr.bf16.mxu0 0
    %2448 = vmatpush2.bf16.msra.mxu0 0
    %2449 = vmatprep.subr.bf16.mxu0 0
    %2450 = vmatpush2.bf16.msra.mxu0 0
    %2451 = vmatprep.subr.bf16.mxu0 0
    %2452 = vmatpush2.bf16.msra.mxu0 0
    %2453 = vmatprep.mubr.bf16.mxu0 0
    %2454 = vmatmul.mubr.bf16.gmra.mxu0 %v2296
    %v2455 = vpop.f32.mrf.mxu0
    %v2456 = vadd.f32 %v2415, %v2455
    %v2457 = vpop.f32.mrf.mxu0
    %v2458 = vadd.f32 %v2417, %v2457
    %v2459 = vpop.f32.mrf.mxu0
    %v2460 = vpop.f32.mrf.mxu0
    %2461 = vdwg.mxu0
    %2462 = vmatprep.subr.bf16.mxu0 %v1660
    %2463 = vmatpush1.bf16.msra.mxu0 %v1659
    %2464 = vmatprep.subr.bf16.mxu0 %v1653
    %2465 = vmatpush1.bf16.msra.mxu0 %v1652
    %2466 = vmatprep.subr.bf16.mxu0 %v1646
    %2467 = vmatpush1.bf16.msra.mxu0 %v1645
    %2468 = vmatprep.subr.bf16.mxu0 %v1639
    %2469 = vmatpush1.bf16.msra.mxu0 %v1638
    %2470 = vmatprep.subr.bf16.mxu0 %v1632
    %2471 = vmatpush1.bf16.msra.mxu0 %v1631
    %2472 = vmatprep.subr.bf16.mxu0 %v1625
    %2473 = vmatpush1.bf16.msra.mxu0 %v1624
    %2474 = vmatprep.subr.bf16.mxu0 %v1618
    %2475 = vmatpush1.bf16.msra.mxu0 %v1617
    %2476 = vmatprep.subr.bf16.mxu0 %v1611
    %2477 = vmatpush1.bf16.msra.mxu0 %v1610
    %2478 = vmatprep.subr.bf16.mxu0 %v1716
    %2479 = vmatpush2.bf16.msra.mxu0 %v1715
    %2480 = vmatprep.subr.bf16.mxu0 %v1709
    %2481 = vmatpush2.bf16.msra.mxu0 %v1708
    %2482 = vmatprep.subr.bf16.mxu0 %v1702
    %2483 = vmatpush2.bf16.msra.mxu0 %v1701
    %2484 = vmatprep.subr.bf16.mxu0 %v1695
    %2485 = vmatpush2.bf16.msra.mxu0 %v1694
    %2486 = vmatprep.subr.bf16.mxu0 %v1688
    %2487 = vmatpush2.bf16.msra.mxu0 %v1687
    %2488 = vmatprep.subr.bf16.mxu0 %v1681
    %2489 = vmatpush2.bf16.msra.mxu0 %v1680
    %2490 = vmatprep.subr.bf16.mxu0 %v1674
    %2491 = vmatpush2.bf16.msra.mxu0 %v1673
    %2492 = vmatprep.subr.bf16.mxu0 %v1667
    %2493 = vmatpush2.bf16.msra.mxu0 %v1666
    %2494 = vmatprep.mubr.bf16.mxu0 %v95
    %2495 = vmatmul.mubr.bf16.gmra.mxu0 %v94
    %v2496 = vpop.f32.mrf.mxu0
    %v2497 = vadd.f32 %v506, %v2496
    %v2498 = vpop.f32.mrf.mxu0
    %v2499 = vadd.f32 %v510, %v2498
    %v2500 = vpop.f32.mrf.mxu0
    %v2501 = vpop.f32.mrf.mxu0
    %2502 = vdwg.mxu0
    %2503 = vmatprep.subr.bf16.mxu0 %v1772
    %2504 = vmatpush1.bf16.msra.mxu0 %v1771
    %2505 = vmatprep.subr.bf16.mxu0 %v1765
    %2506 = vmatpush1.bf16.msra.mxu0 %v1764
    %2507 = vmatprep.subr.bf16.mxu0 %v1758
    %2508 = vmatpush1.bf16.msra.mxu0 %v1757
    %2509 = vmatprep.subr.bf16.mxu0 %v1751
    %2510 = vmatpush1.bf16.msra.mxu0 %v1750
    %2511 = vmatprep.subr.bf16.mxu0 %v1744
    %2512 = vmatpush1.bf16.msra.mxu0 %v1743
    %2513 = vmatprep.subr.bf16.mxu0 %v1737
    %2514 = vmatpush1.bf16.msra.mxu0 %v1736
    %2515 = vmatprep.subr.bf16.mxu0 %v1730
    %2516 = vmatpush1.bf16.msra.mxu0 %v1729
    %2517 = vmatprep.subr.bf16.mxu0 %v1723
    %2518 = vmatpush1.bf16.msra.mxu0 %v1722
    %2519 = vmatprep.subr.bf16.mxu0 %v1828
    %2520 = vmatpush2.bf16.msra.mxu0 %v1827
    %2521 = vmatprep.subr.bf16.mxu0 %v1821
    %2522 = vmatpush2.bf16.msra.mxu0 %v1820
    %2523 = vmatprep.subr.bf16.mxu0 %v1814
    %2524 = vmatpush2.bf16.msra.mxu0 %v1813
    %2525 = vmatprep.subr.bf16.mxu0 %v1807
    %2526 = vmatpush2.bf16.msra.mxu0 %v1806
    %2527 = vmatprep.subr.bf16.mxu0 %v1800
    %2528 = vmatpush2.bf16.msra.mxu0 %v1799
    %2529 = vmatprep.subr.bf16.mxu0 %v1793
    %2530 = vmatpush2.bf16.msra.mxu0 %v1792
    %2531 = vmatprep.subr.bf16.mxu0 %v1786
    %2532 = vmatpush2.bf16.msra.mxu0 %v1785
    %2533 = vmatprep.subr.bf16.mxu0 %v1779
    %2534 = vmatpush2.bf16.msra.mxu0 %v1778
    %2535 = vmatprep.mubr.bf16.mxu0 %v97
    %2536 = vmatmul.mubr.bf16.gmra.mxu0 %v96
    %v2537 = vpop.f32.mrf.mxu0
    %v2538 = vadd.f32 %v2497, %v2537
    %v2539 = vpop.f32.mrf.mxu0
    %v2540 = vadd.f32 %v2499, %v2539
    %v2541 = vpop.f32.mrf.mxu0
    %v2542 = vpop.f32.mrf.mxu0
    %2543 = vdwg.mxu0
    %2544 = vmatprep.subr.bf16.mxu0 %v1884
    %2545 = vmatpush1.bf16.msra.mxu0 %v1883
    %2546 = vmatprep.subr.bf16.mxu0 %v1877
    %2547 = vmatpush1.bf16.msra.mxu0 %v1876
    %2548 = vmatprep.subr.bf16.mxu0 %v1870
    %2549 = vmatpush1.bf16.msra.mxu0 %v1869
    %2550 = vmatprep.subr.bf16.mxu0 %v1863
    %2551 = vmatpush1.bf16.msra.mxu0 %v1862
    %2552 = vmatprep.subr.bf16.mxu0 %v1856
    %2553 = vmatpush1.bf16.msra.mxu0 %v1855
    %2554 = vmatprep.subr.bf16.mxu0 %v1849
    %2555 = vmatpush1.bf16.msra.mxu0 %v1848
    %2556 = vmatprep.subr.bf16.mxu0 %v1842
    %2557 = vmatpush1.bf16.msra.mxu0 %v1841
    %2558 = vmatprep.subr.bf16.mxu0 %v1835
    %2559 = vmatpush1.bf16.msra.mxu0 %v1834
    %2560 = vmatprep.subr.bf16.mxu0 %v1940
    %2561 = vmatpush2.bf16.msra.mxu0 %v1939
    %2562 = vmatprep.subr.bf16.mxu0 %v1933
    %2563 = vmatpush2.bf16.msra.mxu0 %v1932
    %2564 = vmatprep.subr.bf16.mxu0 %v1926
    %2565 = vmatpush2.bf16.msra.mxu0 %v1925
    %2566 = vmatprep.subr.bf16.mxu0 %v1919
    %2567 = vmatpush2.bf16.msra.mxu0 %v1918
    %2568 = vmatprep.subr.bf16.mxu0 %v1912
    %2569 = vmatpush2.bf16.msra.mxu0 %v1911
    %2570 = vmatprep.subr.bf16.mxu0 %v1905
    %2571 = vmatpush2.bf16.msra.mxu0 %v1904
    %2572 = vmatprep.subr.bf16.mxu0 %v1898
    %2573 = vmatpush2.bf16.msra.mxu0 %v1897
    %2574 = vmatprep.subr.bf16.mxu0 %v1891
    %2575 = vmatpush2.bf16.msra.mxu0 %v1890
    %2576 = vmatprep.mubr.bf16.mxu0 %v99
    %2577 = vmatmul.mubr.bf16.gmra.mxu0 %v98
    %v2578 = vpop.f32.mrf.mxu0
    %v2579 = vadd.f32 %v2538, %v2578
    %v2580 = vpop.f32.mrf.mxu0
    %v2581 = vadd.f32 %v2540, %v2580
    %v2582 = vpop.f32.mrf.mxu0
    %v2583 = vpop.f32.mrf.mxu0
    %2584 = vdwg.mxu0
    %2585 = vmatprep.subr.bf16.mxu0 0
    %2586 = vmatpush1.bf16.msra.mxu0 0
    %2587 = vmatprep.subr.bf16.mxu0 0
    %2588 = vmatpush1.bf16.msra.mxu0 0
    %2589 = vmatprep.subr.bf16.mxu0 0
    %2590 = vmatpush1.bf16.msra.mxu0 0
    %2591 = vmatprep.subr.bf16.mxu0 0
    %2592 = vmatpush1.bf16.msra.mxu0 0
    %2593 = vmatprep.subr.bf16.mxu0 0
    %2594 = vmatpush1.bf16.msra.mxu0 0
    %2595 = vmatprep.subr.bf16.mxu0 0
    %2596 = vmatpush1.bf16.msra.mxu0 0
    %2597 = vmatprep.subr.bf16.mxu0 0
    %2598 = vmatpush1.bf16.msra.mxu0 0
    %2599 = vmatprep.subr.bf16.mxu0 %v1947
    %2600 = vmatpush1.bf16.msra.mxu0 %v1946
    %2601 = vmatprep.subr.bf16.mxu0 0
    %2602 = vmatpush2.bf16.msra.mxu0 0
    %2603 = vmatprep.subr.bf16.mxu0 0
    %2604 = vmatpush2.bf16.msra.mxu0 0
    %2605 = vmatprep.subr.bf16.mxu0 0
    %2606 = vmatpush2.bf16.msra.mxu0 0
    %2607 = vmatprep.subr.bf16.mxu0 0
    %2608 = vmatpush2.bf16.msra.mxu0 0
    %2609 = vmatprep.subr.bf16.mxu0 0
    %2610 = vmatpush2.bf16.msra.mxu0 0
    %2611 = vmatprep.subr.bf16.mxu0 0
    %2612 = vmatpush2.bf16.msra.mxu0 0
    %2613 = vmatprep.subr.bf16.mxu0 0
    %2614 = vmatpush2.bf16.msra.mxu0 0
    %2615 = vmatprep.subr.bf16.mxu0 0
    %2616 = vmatpush2.bf16.msra.mxu0 0
    %2617 = vmatprep.mubr.bf16.mxu0 0
    %2618 = vmatmul.mubr.bf16.gmra.mxu0 %v2296
    %v2619 = vpop.f32.mrf.mxu0
    %v2620 = vadd.f32 %v2579, %v2619
    %v2621 = vpop.f32.mrf.mxu0
    %v2622 = vadd.f32 %v2581, %v2621
    %v2623 = vpop.f32.mrf.mxu0
    %v2624 = vpop.f32.mrf.mxu0
    %2625 = vdwg.mxu0
    %2626 = vmatprep.subr.bf16.mxu0 %v1662
    %2627 = vmatpush1.bf16.msra.mxu0 %v1661
    %2628 = vmatprep.subr.bf16.mxu0 %v1655
    %2629 = vmatpush1.bf16.msra.mxu0 %v1654
    %2630 = vmatprep.subr.bf16.mxu0 %v1648
    %2631 = vmatpush1.bf16.msra.mxu0 %v1647
    %2632 = vmatprep.subr.bf16.mxu0 %v1641
    %2633 = vmatpush1.bf16.msra.mxu0 %v1640
    %2634 = vmatprep.subr.bf16.mxu0 %v1634
    %2635 = vmatpush1.bf16.msra.mxu0 %v1633
    %2636 = vmatprep.subr.bf16.mxu0 %v1627
    %2637 = vmatpush1.bf16.msra.mxu0 %v1626
    %2638 = vmatprep.subr.bf16.mxu0 %v1620
    %2639 = vmatpush1.bf16.msra.mxu0 %v1619
    %2640 = vmatprep.subr.bf16.mxu0 %v1613
    %2641 = vmatpush1.bf16.msra.mxu0 %v1612
    %2642 = vmatprep.subr.bf16.mxu0 %v1718
    %2643 = vmatpush2.bf16.msra.mxu0 %v1717
    %2644 = vmatprep.subr.bf16.mxu0 %v1711
    %2645 = vmatpush2.bf16.msra.mxu0 %v1710
    %2646 = vmatprep.subr.bf16.mxu0 %v1704
    %2647 = vmatpush2.bf16.msra.mxu0 %v1703
    %2648 = vmatprep.subr.bf16.mxu0 %v1697
    %2649 = vmatpush2.bf16.msra.mxu0 %v1696
    %2650 = vmatprep.subr.bf16.mxu0 %v1690
    %2651 = vmatpush2.bf16.msra.mxu0 %v1689
    %2652 = vmatprep.subr.bf16.mxu0 %v1683
    %2653 = vmatpush2.bf16.msra.mxu0 %v1682
    %2654 = vmatprep.subr.bf16.mxu0 %v1676
    %2655 = vmatpush2.bf16.msra.mxu0 %v1675
    %2656 = vmatprep.subr.bf16.mxu0 %v1669
    %2657 = vmatpush2.bf16.msra.mxu0 %v1668
    %2658 = vmatprep.mubr.bf16.mxu0 %v95
    %2659 = vmatmul.mubr.bf16.gmra.mxu0 %v94
    %v2660 = vpop.f32.mrf.mxu0
    %v2661 = vadd.f32 %v514, %v2660
    %v2662 = vpop.f32.mrf.mxu0
    %v2663 = vadd.f32 %v518, %v2662
    %v2664 = vpop.f32.mrf.mxu0
    %v2665 = vpop.f32.mrf.mxu0
    %2666 = vdwg.mxu0
    %2667 = vmatprep.subr.bf16.mxu0 %v1774
    %2668 = vmatpush1.bf16.msra.mxu0 %v1773
    %2669 = vmatprep.subr.bf16.mxu0 %v1767
    %2670 = vmatpush1.bf16.msra.mxu0 %v1766
    %2671 = vmatprep.subr.bf16.mxu0 %v1760
    %2672 = vmatpush1.bf16.msra.mxu0 %v1759
    %2673 = vmatprep.subr.bf16.mxu0 %v1753
    %2674 = vmatpush1.bf16.msra.mxu0 %v1752
    %2675 = vmatprep.subr.bf16.mxu0 %v1746
    %2676 = vmatpush1.bf16.msra.mxu0 %v1745
    %2677 = vmatprep.subr.bf16.mxu0 %v1739
    %2678 = vmatpush1.bf16.msra.mxu0 %v1738
    %2679 = vmatprep.subr.bf16.mxu0 %v1732
    %2680 = vmatpush1.bf16.msra.mxu0 %v1731
    %2681 = vmatprep.subr.bf16.mxu0 %v1725
    %2682 = vmatpush1.bf16.msra.mxu0 %v1724
    %2683 = vmatprep.subr.bf16.mxu0 %v1830
    %2684 = vmatpush2.bf16.msra.mxu0 %v1829
    %2685 = vmatprep.subr.bf16.mxu0 %v1823
    %2686 = vmatpush2.bf16.msra.mxu0 %v1822
    %2687 = vmatprep.subr.bf16.mxu0 %v1816
    %2688 = vmatpush2.bf16.msra.mxu0 %v1815
    %2689 = vmatprep.subr.bf16.mxu0 %v1809
    %2690 = vmatpush2.bf16.msra.mxu0 %v1808
    %2691 = vmatprep.subr.bf16.mxu0 %v1802
    %2692 = vmatpush2.bf16.msra.mxu0 %v1801
    %2693 = vmatprep.subr.bf16.mxu0 %v1795
    %2694 = vmatpush2.bf16.msra.mxu0 %v1794
    %2695 = vmatprep.subr.bf16.mxu0 %v1788
    %2696 = vmatpush2.bf16.msra.mxu0 %v1787
    %2697 = vmatprep.subr.bf16.mxu0 %v1781
    %2698 = vmatpush2.bf16.msra.mxu0 %v1780
    %2699 = vmatprep.mubr.bf16.mxu0 %v97
    %2700 = vmatmul.mubr.bf16.gmra.mxu0 %v96
    %v2701 = vpop.f32.mrf.mxu0
    %v2702 = vadd.f32 %v2661, %v2701
    %v2703 = vpop.f32.mrf.mxu0
    %v2704 = vadd.f32 %v2663, %v2703
    %v2705 = vpop.f32.mrf.mxu0
    %v2706 = vpop.f32.mrf.mxu0
    %2707 = vdwg.mxu0
    %2708 = vmatprep.subr.bf16.mxu0 %v1886
    %2709 = vmatpush1.bf16.msra.mxu0 %v1885
    %2710 = vmatprep.subr.bf16.mxu0 %v1879
    %2711 = vmatpush1.bf16.msra.mxu0 %v1878
    %2712 = vmatprep.subr.bf16.mxu0 %v1872
    %2713 = vmatpush1.bf16.msra.mxu0 %v1871
    %2714 = vmatprep.subr.bf16.mxu0 %v1865
    %2715 = vmatpush1.bf16.msra.mxu0 %v1864
    %2716 = vmatprep.subr.bf16.mxu0 %v1858
    %2717 = vmatpush1.bf16.msra.mxu0 %v1857
    %2718 = vmatprep.subr.bf16.mxu0 %v1851
    %2719 = vmatpush1.bf16.msra.mxu0 %v1850
    %2720 = vmatprep.subr.bf16.mxu0 %v1844
    %2721 = vmatpush1.bf16.msra.mxu0 %v1843
    %2722 = vmatprep.subr.bf16.mxu0 %v1837
    %2723 = vmatpush1.bf16.msra.mxu0 %v1836
    %2724 = vmatprep.subr.bf16.mxu0 %v1942
    %2725 = vmatpush2.bf16.msra.mxu0 %v1941
    %2726 = vmatprep.subr.bf16.mxu0 %v1935
    %2727 = vmatpush2.bf16.msra.mxu0 %v1934
    %2728 = vmatprep.subr.bf16.mxu0 %v1928
    %2729 = vmatpush2.bf16.msra.mxu0 %v1927
    %2730 = vmatprep.subr.bf16.mxu0 %v1921
    %2731 = vmatpush2.bf16.msra.mxu0 %v1920
    %2732 = vmatprep.subr.bf16.mxu0 %v1914
    %2733 = vmatpush2.bf16.msra.mxu0 %v1913
    %2734 = vmatprep.subr.bf16.mxu0 %v1907
    %2735 = vmatpush2.bf16.msra.mxu0 %v1906
    %2736 = vmatprep.subr.bf16.mxu0 %v1900
    %2737 = vmatpush2.bf16.msra.mxu0 %v1899
    %2738 = vmatprep.subr.bf16.mxu0 %v1893
    %2739 = vmatpush2.bf16.msra.mxu0 %v1892
    %2740 = vmatprep.mubr.bf16.mxu0 %v99
    %2741 = vmatmul.mubr.bf16.gmra.mxu0 %v98
    %v2742 = vpop.f32.mrf.mxu0
    %v2743 = vadd.f32 %v2702, %v2742
    %v2744 = vpop.f32.mrf.mxu0
    %v2745 = vadd.f32 %v2704, %v2744
    %v2746 = vpop.f32.mrf.mxu0
    %v2747 = vpop.f32.mrf.mxu0
    %2748 = vdwg.mxu0
    %2749 = vmatprep.subr.bf16.mxu0 0
    %2750 = vmatpush1.bf16.msra.mxu0 0
    %2751 = vmatprep.subr.bf16.mxu0 0
    %2752 = vmatpush1.bf16.msra.mxu0 0
    %2753 = vmatprep.subr.bf16.mxu0 0
    %2754 = vmatpush1.bf16.msra.mxu0 0
    %2755 = vmatprep.subr.bf16.mxu0 0
    %2756 = vmatpush1.bf16.msra.mxu0 0
    %2757 = vmatprep.subr.bf16.mxu0 0
    %2758 = vmatpush1.bf16.msra.mxu0 0
    %2759 = vmatprep.subr.bf16.mxu0 0
    %2760 = vmatpush1.bf16.msra.mxu0 0
    %2761 = vmatprep.subr.bf16.mxu0 0
    %2762 = vmatpush1.bf16.msra.mxu0 0
    %2763 = vmatprep.subr.bf16.mxu0 %v1949
    %2764 = vmatpush1.bf16.msra.mxu0 %v1948
    %2765 = vmatprep.subr.bf16.mxu0 0
    %2766 = vmatpush2.bf16.msra.mxu0 0
    %2767 = vmatprep.subr.bf16.mxu0 0
    %2768 = vmatpush2.bf16.msra.mxu0 0
    %2769 = vmatprep.subr.bf16.mxu0 0
    %2770 = vmatpush2.bf16.msra.mxu0 0
    %2771 = vmatprep.subr.bf16.mxu0 0
    %2772 = vmatpush2.bf16.msra.mxu0 0
    %2773 = vmatprep.subr.bf16.mxu0 0
    %2774 = vmatpush2.bf16.msra.mxu0 0
    %2775 = vmatprep.subr.bf16.mxu0 0
    %2776 = vmatpush2.bf16.msra.mxu0 0
    %2777 = vmatprep.subr.bf16.mxu0 0
    %2778 = vmatpush2.bf16.msra.mxu0 0
    %2779 = vmatprep.subr.bf16.mxu0 0
    %2780 = vmatpush2.bf16.msra.mxu0 0
    %2781 = vmatprep.mubr.bf16.mxu0 0
    %2782 = vmatmul.mubr.bf16.gmra.mxu0 %v2296
    %v2783 = vpop.f32.mrf.mxu0
    %v2784 = vadd.f32 %v2743, %v2783
    %v2785 = vpop.f32.mrf.mxu0
    %v2786 = vadd.f32 %v2745, %v2785
    %v2787 = vpop.f32.mrf.mxu0
    %v2788 = vpop.f32.mrf.mxu0
    %2789 = vdwg.mxu0
    %2790 = vmatprep.subr.bf16.mxu0 0
    %2791 = vmatpush1.bf16.msra.mxu0 %v1663
    %2792 = vmatprep.subr.bf16.mxu0 0
    %2793 = vmatpush1.bf16.msra.mxu0 %v1656
    %2794 = vmatprep.subr.bf16.mxu0 0
    %2795 = vmatpush1.bf16.msra.mxu0 %v1649
    %2796 = vmatprep.subr.bf16.mxu0 0
    %2797 = vmatpush1.bf16.msra.mxu0 %v1642
    %2798 = vmatprep.subr.bf16.mxu0 0
    %2799 = vmatpush1.bf16.msra.mxu0 %v1635
    %2800 = vmatprep.subr.bf16.mxu0 0
    %2801 = vmatpush1.bf16.msra.mxu0 %v1628
    %2802 = vmatprep.subr.bf16.mxu0 0
    %2803 = vmatpush1.bf16.msra.mxu0 %v1621
    %2804 = vmatprep.subr.bf16.mxu0 0
    %2805 = vmatpush1.bf16.msra.mxu0 %v1614
    %2806 = vmatprep.subr.bf16.mxu0 0
    %2807 = vmatpush2.bf16.msra.mxu0 %v1719
    %2808 = vmatprep.subr.bf16.mxu0 0
    %2809 = vmatpush2.bf16.msra.mxu0 %v1712
    %2810 = vmatprep.subr.bf16.mxu0 0
    %2811 = vmatpush2.bf16.msra.mxu0 %v1705
    %2812 = vmatprep.subr.bf16.mxu0 0
    %2813 = vmatpush2.bf16.msra.mxu0 %v1698
    %2814 = vmatprep.subr.bf16.mxu0 0
    %2815 = vmatpush2.bf16.msra.mxu0 %v1691
    %2816 = vmatprep.subr.bf16.mxu0 0
    %2817 = vmatpush2.bf16.msra.mxu0 %v1684
    %2818 = vmatprep.subr.bf16.mxu0 0
    %2819 = vmatpush2.bf16.msra.mxu0 %v1677
    %2820 = vmatprep.subr.bf16.mxu0 0
    %2821 = vmatpush2.bf16.msra.mxu0 %v1670
    %2822 = vmatprep.mubr.bf16.mxu0 %v95
    %2823 = vmatmul.mubr.bf16.gmra.mxu0 %v94
    %v2824 = vpop.f32.mrf.mxu0
    %v2825 = vadd.f32 %v522, %v2824
    %v2826 = vpop.f32.mrf.mxu0
    %v2827 = vpop.f32.mrf.mxu0
    %v2828 = vpop.f32.mrf.mxu0
    %2829 = vdwg.mxu0
    %2830 = vmatprep.subr.bf16.mxu0 0
    %2831 = vmatpush1.bf16.msra.mxu0 %v1775
    %2832 = vmatprep.subr.bf16.mxu0 0
    %2833 = vmatpush1.bf16.msra.mxu0 %v1768
    %2834 = vmatprep.subr.bf16.mxu0 0
    %2835 = vmatpush1.bf16.msra.mxu0 %v1761
    %2836 = vmatprep.subr.bf16.mxu0 0
    %2837 = vmatpush1.bf16.msra.mxu0 %v1754
    %2838 = vmatprep.subr.bf16.mxu0 0
    %2839 = vmatpush1.bf16.msra.mxu0 %v1747
    %2840 = vmatprep.subr.bf16.mxu0 0
    %2841 = vmatpush1.bf16.msra.mxu0 %v1740
    %2842 = vmatprep.subr.bf16.mxu0 0
    %2843 = vmatpush1.bf16.msra.mxu0 %v1733
    %2844 = vmatprep.subr.bf16.mxu0 0
    %2845 = vmatpush1.bf16.msra.mxu0 %v1726
    %2846 = vmatprep.subr.bf16.mxu0 0
    %2847 = vmatpush2.bf16.msra.mxu0 %v1831
    %2848 = vmatprep.subr.bf16.mxu0 0
    %2849 = vmatpush2.bf16.msra.mxu0 %v1824
    %2850 = vmatprep.subr.bf16.mxu0 0
    %2851 = vmatpush2.bf16.msra.mxu0 %v1817
    %2852 = vmatprep.subr.bf16.mxu0 0
    %2853 = vmatpush2.bf16.msra.mxu0 %v1810
    %2854 = vmatprep.subr.bf16.mxu0 0
    %2855 = vmatpush2.bf16.msra.mxu0 %v1803
    %2856 = vmatprep.subr.bf16.mxu0 0
    %2857 = vmatpush2.bf16.msra.mxu0 %v1796
    %2858 = vmatprep.subr.bf16.mxu0 0
    %2859 = vmatpush2.bf16.msra.mxu0 %v1789
    %2860 = vmatprep.subr.bf16.mxu0 0
    %2861 = vmatpush2.bf16.msra.mxu0 %v1782
    %2862 = vmatprep.mubr.bf16.mxu0 %v97
    %2863 = vmatmul.mubr.bf16.gmra.mxu0 %v96
    %v2864 = vpop.f32.mrf.mxu0
    %v2865 = vadd.f32 %v2825, %v2864
    %v2866 = vpop.f32.mrf.mxu0
    %v2867 = vpop.f32.mrf.mxu0
    %v2868 = vpop.f32.mrf.mxu0
    %2869 = vdwg.mxu0
    %2870 = vmatprep.subr.bf16.mxu0 0
    %2871 = vmatpush1.bf16.msra.mxu0 %v1887
    %2872 = vmatprep.subr.bf16.mxu0 0
    %2873 = vmatpush1.bf16.msra.mxu0 %v1880
    %2874 = vmatprep.subr.bf16.mxu0 0
    %2875 = vmatpush1.bf16.msra.mxu0 %v1873
    %2876 = vmatprep.subr.bf16.mxu0 0
    %2877 = vmatpush1.bf16.msra.mxu0 %v1866
    %2878 = vmatprep.subr.bf16.mxu0 0
    %2879 = vmatpush1.bf16.msra.mxu0 %v1859
    %2880 = vmatprep.subr.bf16.mxu0 0
    %2881 = vmatpush1.bf16.msra.mxu0 %v1852
    %2882 = vmatprep.subr.bf16.mxu0 0
    %2883 = vmatpush1.bf16.msra.mxu0 %v1845
    %2884 = vmatprep.subr.bf16.mxu0 0
    %2885 = vmatpush1.bf16.msra.mxu0 %v1838
    %2886 = vmatprep.subr.bf16.mxu0 0
    %2887 = vmatpush2.bf16.msra.mxu0 %v1943
    %2888 = vmatprep.subr.bf16.mxu0 0
    %2889 = vmatpush2.bf16.msra.mxu0 %v1936
    %2890 = vmatprep.subr.bf16.mxu0 0
    %2891 = vmatpush2.bf16.msra.mxu0 %v1929
    %2892 = vmatprep.subr.bf16.mxu0 0
    %2893 = vmatpush2.bf16.msra.mxu0 %v1922
    %2894 = vmatprep.subr.bf16.mxu0 0
    %2895 = vmatpush2.bf16.msra.mxu0 %v1915
    %2896 = vmatprep.subr.bf16.mxu0 0
    %2897 = vmatpush2.bf16.msra.mxu0 %v1908
    %2898 = vmatprep.subr.bf16.mxu0 0
    %2899 = vmatpush2.bf16.msra.mxu0 %v1901
    %2900 = vmatprep.subr.bf16.mxu0 0
    %2901 = vmatpush2.bf16.msra.mxu0 %v1894
    %2902 = vmatprep.mubr.bf16.mxu0 %v99
    %2903 = vmatmul.mubr.bf16.gmra.mxu0 %v98
    %v2904 = vpop.f32.mrf.mxu0
    %v2905 = vadd.f32 %v2865, %v2904
    %v2906 = vpop.f32.mrf.mxu0
    %v2907 = vpop.f32.mrf.mxu0
    %v2908 = vpop.f32.mrf.mxu0
    %2909 = vdwg.mxu0
    %2910 = vmatprep.subr.bf16.mxu0 0
    %2911 = vmatpush1.bf16.msra.mxu0 0
    %2912 = vmatprep.subr.bf16.mxu0 0
    %2913 = vmatpush1.bf16.msra.mxu0 0
    %2914 = vmatprep.subr.bf16.mxu0 0
    %2915 = vmatpush1.bf16.msra.mxu0 0
    %2916 = vmatprep.subr.bf16.mxu0 0
    %2917 = vmatpush1.bf16.msra.mxu0 0
    %2918 = vmatprep.subr.bf16.mxu0 0
    %2919 = vmatpush1.bf16.msra.mxu0 0
    %2920 = vmatprep.subr.bf16.mxu0 0
    %2921 = vmatpush1.bf16.msra.mxu0 0
    %2922 = vmatprep.subr.bf16.mxu0 0
    %2923 = vmatpush1.bf16.msra.mxu0 0
    %2924 = vmatprep.subr.bf16.mxu0 0
    %2925 = vmatpush1.bf16.msra.mxu0 %v1950
    %2926 = vmatprep.subr.bf16.mxu0 0
    %2927 = vmatpush2.bf16.msra.mxu0 0
    %2928 = vmatprep.subr.bf16.mxu0 0
    %2929 = vmatpush2.bf16.msra.mxu0 0
    %2930 = vmatprep.subr.bf16.mxu0 0
    %2931 = vmatpush2.bf16.msra.mxu0 0
    %2932 = vmatprep.subr.bf16.mxu0 0
    %2933 = vmatpush2.bf16.msra.mxu0 0
    %2934 = vmatprep.subr.bf16.mxu0 0
    %2935 = vmatpush2.bf16.msra.mxu0 0
    %2936 = vmatprep.subr.bf16.mxu0 0
    %2937 = vmatpush2.bf16.msra.mxu0 0
    %2938 = vmatprep.subr.bf16.mxu0 0
    %2939 = vmatpush2.bf16.msra.mxu0 0
    %2940 = vmatprep.subr.bf16.mxu0 0
    %2941 = vmatpush2.bf16.msra.mxu0 0
    %2942 = vmatprep.mubr.bf16.mxu0 0
    %2943 = vmatmul.mubr.bf16.gmra.mxu0 %v2296
    %v2944 = vpop.f32.mrf.mxu0
    %v2945 = vadd.f32 %v2905, %v2944
    %v2946 = vpop.f32.mrf.mxu0
    %v2947 = vpop.f32.mrf.mxu0
    %v2948 = vpop.f32.mrf.mxu0
    %2949 = vdwg.mxu0
    %v2950 = vmax.f32 %v2456, 0.0
    %v2951 = vmax.f32 %v2458, 0.0
    %v2952 = vmax.f32 %v2620, 0.0
    %v2953 = vmax.f32 %v2622, 0.0
    %v2954 = vmax.f32 %v2784, 0.0
    %v2955 = vmax.f32 %v2786, 0.0
    %v2956 = vmax.f32 %v2945, 0.0
    %v2957 = vpack.c.bf16 %v2950, %v2950
    %v2958 = vpack.c.bf16 %v2951, %v2951
    %v2959 = vpack.c.bf16 %v2952, %v2952
    %v2960 = vpack.c.bf16 %v2953, %v2953
    %v2961 = vpack.c.bf16 %v2954, %v2954
    %v2962 = vpack.c.bf16 %v2955, %v2955
    %v2963 = vpack.c.bf16 %v2956, %v2956
    %v2964 = vld [vmem:[#allocation8] sm:$0xf]
    %v2965 = vld [vmem:[#allocation8 + $0x4] sm:$0xf]
    %v2966 = vld [vmem:[#allocation8 + $0x8] sm:$0xf]
    %v2967 = vld [vmem:[#allocation8 + $0xc] sm:$0xf]
    %v2968 = vld [vmem:[#allocation8 + $0x10] sm:$0xf]
    %v2969 = vld [vmem:[#allocation8 + $0x14] sm:$0xf]
    %v2970 = vld [vmem:[#allocation8 + $0x18] sm:$0xf]
    %v2971 = vld [vmem:[#allocation8 + $0x1c] sm:$0xf]
    %v2972 = vld [vmem:[#allocation8 + $0x20] sm:$0xf]
    %v2973 = vld [vmem:[#allocation8 + $0x24] sm:$0xf]
    %v2974 = vld [vmem:[#allocation8 + $0x28] sm:$0xf]
    %v2975 = vld [vmem:[#allocation8 + $0x2c] sm:$0xf]
    %v2976 = vld [vmem:[#allocation8 + $0x30] sm:$0xf]
    %v2977 = vld [vmem:[#allocation8 + $0x34] sm:$0xf]
    %v2978 = vld [vmem:[#allocation8 + $0x38] sm:$0xf]
    %v2979 = vld [vmem:[#allocation8 + $0x3c] sm:$0xf]
    %v2980 = vld [vmem:[#allocation8 + $0x40] sm:$0xf]
    %v2981 = vld [vmem:[#allocation8 + $0x44] sm:$0xf]
    %v2982 = vld [vmem:[#allocation8 + $0x48] sm:$0xf]
    %v2983 = vld [vmem:[#allocation8 + $0x4c] sm:$0xf]
    %v2984 = vld [vmem:[#allocation8 + $0x50] sm:$0xf]
    %v2985 = vld [vmem:[#allocation8 + $0x54] sm:$0xf]
    %v2986 = vld [vmem:[#allocation8 + $0x58] sm:$0xf]
    %v2987 = vld [vmem:[#allocation8 + $0x5c] sm:$0xf]
    %v2988 = vld [vmem:[#allocation8 + $0x60] sm:$0xf]
    %v2989 = vld [vmem:[#allocation8 + $0x64] sm:$0xf]
    %v2990 = vld [vmem:[#allocation8 + $0x68] sm:$0xf]
    %v2991 = vld [vmem:[#allocation8 + $0x6c] sm:$0xf]
    %v2992 = vld [vmem:[#allocation8 + $0x70] sm:$0xf]
    %v2993 = vld [vmem:[#allocation8 + $0x74] sm:$0xf]
    %v2994 = vld [vmem:[#allocation8 + $0x78] sm:$0xf]
    %v2995 = vld [vmem:[#allocation8 + $0x7c] sm:$0xf]
    %v2996 = vld [vmem:[#allocation8 + $0x80] sm:$0xf]
    %v2997 = vld [vmem:[#allocation8 + $0x84] sm:$0xf]
    %v2998 = vld [vmem:[#allocation8 + $0x88] sm:$0xf]
    %v2999 = vld [vmem:[#allocation8 + $0x8c] sm:$0xf]
    %v3000 = vld [vmem:[#allocation8 + $0x90] sm:$0xf]
    %v3001 = vld [vmem:[#allocation8 + $0x94] sm:$0xf]
    %v3002 = vld [vmem:[#allocation8 + $0x98] sm:$0xf]
    %v3003 = vld [vmem:[#allocation8 + $0x9c] sm:$0xf]
    %v3004 = vld [vmem:[#allocation8 + $0xa0] sm:$0xf]
    %v3005 = vld [vmem:[#allocation8 + $0xa4] sm:$0xf]
    %v3006 = vld [vmem:[#allocation8 + $0xa8] sm:$0xf]
    %v3007 = vld [vmem:[#allocation8 + $0xac] sm:$0xf]
    %v3008 = vld [vmem:[#allocation8 + $0xb0] sm:$0xf]
    %v3009 = vld [vmem:[#allocation8 + $0xb4] sm:$0xf]
    %v3010 = vld [vmem:[#allocation8 + $0xb8] sm:$0xf]
    %v3011 = vld [vmem:[#allocation8 + $0xbc] sm:$0xf]
    %v3012 = vld [vmem:[#allocation8 + $0xc0] sm:$0xf]
    %v3013 = vld [vmem:[#allocation8 + $0xc4] sm:$0xf]
    %v3014 = vld [vmem:[#allocation8 + $0xc8] sm:$0xf]
    %v3015 = vld [vmem:[#allocation8 + $0xcc] sm:$0xf]
    %v3016 = vld [vmem:[#allocation8 + $0xd0] sm:$0xf]
    %v3017 = vld [vmem:[#allocation8 + $0xd4] sm:$0xf]
    %v3018 = vld [vmem:[#allocation8 + $0xd8] sm:$0xf]
    %v3019 = vld [vmem:[#allocation8 + $0xdc] sm:$0xf]
    %v3020 = vld [vmem:[#allocation8 + $0xe0] sm:$0xf]
    %v3021 = vld [vmem:[#allocation8 + $0xe4] sm:$0xf]
    %v3022 = vld [vmem:[#allocation8 + $0xe8] sm:$0xf]
    %v3023 = vld [vmem:[#allocation8 + $0xec] sm:$0xf]
    %v3024 = vld [vmem:[#allocation8 + $0xf0] sm:$0xf]
    %v3025 = vld [vmem:[#allocation8 + $0xf4] sm:$0xf]
    %v3026 = vld [vmem:[#allocation8 + $0xf8] sm:$0xf]
    %v3027 = vld [vmem:[#allocation8 + $0xfc] sm:$0xf]
    %v3028 = vld [vmem:[#allocation8 + $0x100] sm:$0xf]
    %v3029 = vld [vmem:[#allocation8 + $0x104] sm:$0xf]
    %v3030 = vld [vmem:[#allocation8 + $0x108] sm:$0xf]
    %v3031 = vld [vmem:[#allocation8 + $0x10c] sm:$0xf]
    %v3032 = vld [vmem:[#allocation8 + $0x110] sm:$0xf]
    %v3033 = vld [vmem:[#allocation8 + $0x114] sm:$0xf]
    %v3034 = vld [vmem:[#allocation8 + $0x118] sm:$0xf]
    %v3035 = vld [vmem:[#allocation8 + $0x11c] sm:$0xf]
    %v3036 = vld [vmem:[#allocation8 + $0x120] sm:$0xf]
    %v3037 = vld [vmem:[#allocation8 + $0x124] sm:$0xf]
    %v3038 = vld [vmem:[#allocation8 + $0x128] sm:$0xf]
    %v3039 = vld [vmem:[#allocation8 + $0x12c] sm:$0xf]
    %v3040 = vld [vmem:[#allocation8 + $0x130] sm:$0xf]
    %v3041 = vld [vmem:[#allocation8 + $0x134] sm:$0xf]
    %v3042 = vld [vmem:[#allocation8 + $0x138] sm:$0xf]
    %v3043 = vld [vmem:[#allocation8 + $0x13c] sm:$0xf]
    %v3044 = vld [vmem:[#allocation8 + $0x140] sm:$0xf]
    %v3045 = vld [vmem:[#allocation8 + $0x144] sm:$0xf]
    %v3046 = vld [vmem:[#allocation8 + $0x148] sm:$0xf]
    %v3047 = vld [vmem:[#allocation8 + $0x14c] sm:$0xf]
    %v3048 = vld [vmem:[#allocation8 + $0x150] sm:$0xf]
    %v3049 = vld [vmem:[#allocation8 + $0x154] sm:$0xf]
    %v3050 = vld [vmem:[#allocation8 + $0x158] sm:$0xf]
    %v3051 = vld [vmem:[#allocation8 + $0x15c] sm:$0xf]
    %v3052 = vld [vmem:[#allocation8 + $0x160] sm:$0xf]
    %v3053 = vld [vmem:[#allocation8 + $0x164] sm:$0xf]
    %v3054 = vld [vmem:[#allocation8 + $0x168] sm:$0xf]
    %v3055 = vld [vmem:[#allocation8 + $0x16c] sm:$0xf]
    %v3056 = vld [vmem:[#allocation8 + $0x170] sm:$0xf]
    %v3057 = vld [vmem:[#allocation8 + $0x174] sm:$0xf]
    %v3058 = vld [vmem:[#allocation8 + $0x178] sm:$0xf]
    %v3059 = vld [vmem:[#allocation8 + $0x17c] sm:$0xf]
    %v3060 = vld [vmem:[#allocation8 + $0x180] sm:$0xf]
    %v3061 = vld [vmem:[#allocation8 + $0x184] sm:$0xf]
    %v3062 = vld [vmem:[#allocation10] sm:$0x1]
    %v3064 = vlaneseq
    %v3065 = vshrl.u32 %v3064, 7
    %v3066 = vsub.s32 0, %v3065
    %v3067 = vrot.slane %v3062, %v3066
    %v3167 = vunpack.c.l.b16 %v2964
    %v3168 = vunpack.c.l.b16 %v2965
    %v3169 = vunpack.c.l.b16 %v2966
    %v3170 = vunpack.c.l.b16 %v2967
    %v3171 = vunpack.c.l.b16 %v2968
    %v3172 = vunpack.c.l.b16 %v2969
    %v3173 = vunpack.c.l.b16 %v2970
    %v3174 = vunpack.c.l.b16 %v2971
    %v3175 = vunpack.c.l.b16 %v2972
    %v3176 = vunpack.c.l.b16 %v2973
    %v3177 = vunpack.c.l.b16 %v2974
    %v3178 = vunpack.c.l.b16 %v2975
    %v3179 = vunpack.c.l.b16 %v2976
    %v3180 = vunpack.c.l.b16 %v2977
    %v3181 = vunpack.c.l.b16 %v2978
    %v3182 = vunpack.c.l.b16 %v2979
    %v3183 = vunpack.c.l.b16 %v2980
    %v3184 = vunpack.c.l.b16 %v2981
    %v3185 = vunpack.c.l.b16 %v2982
    %v3186 = vunpack.c.l.b16 %v2983
    %v3187 = vunpack.c.l.b16 %v2984
    %v3188 = vunpack.c.l.b16 %v2985
    %v3189 = vunpack.c.l.b16 %v2986
    %v3190 = vunpack.c.l.b16 %v2987
    %v3191 = vunpack.c.l.b16 %v2988
    %v3192 = vunpack.c.l.b16 %v2989
    %v3193 = vunpack.c.l.b16 %v2990
    %v3194 = vunpack.c.l.b16 %v2991
    %v3195 = vunpack.c.l.b16 %v2992
    %v3196 = vunpack.c.l.b16 %v2993
    %v3197 = vunpack.c.l.b16 %v2994
    %v3198 = vunpack.c.l.b16 %v2995
    %v3199 = vunpack.c.l.b16 %v2996
    %v3200 = vunpack.c.l.b16 %v2997
    %v3201 = vunpack.c.l.b16 %v2998
    %v3202 = vunpack.c.l.b16 %v2999
    %v3203 = vunpack.c.l.b16 %v3000
    %v3204 = vunpack.c.l.b16 %v3001
    %v3205 = vunpack.c.l.b16 %v3002
    %v3206 = vunpack.c.l.b16 %v3003
    %v3207 = vunpack.c.l.b16 %v3004
    %v3208 = vunpack.c.l.b16 %v3005
    %v3209 = vunpack.c.l.b16 %v3006
    %v3210 = vunpack.c.l.b16 %v3007
    %v3211 = vunpack.c.l.b16 %v3008
    %v3212 = vunpack.c.l.b16 %v3009
    %v3213 = vunpack.c.l.b16 %v3010
    %v3214 = vunpack.c.l.b16 %v3011
    %v3215 = vunpack.c.l.b16 %v3012
    %v3216 = vunpack.c.l.b16 %v3013
    %v3217 = vunpack.c.l.b16 %v3014
    %v3218 = vunpack.c.l.b16 %v3015
    %v3219 = vunpack.c.l.b16 %v3016
    %v3220 = vunpack.c.l.b16 %v3017
    %v3221 = vunpack.c.l.b16 %v3018
    %v3222 = vunpack.c.l.b16 %v3019
    %v3223 = vunpack.c.l.b16 %v3020
    %v3224 = vunpack.c.l.b16 %v3021
    %v3225 = vunpack.c.l.b16 %v3022
    %v3226 = vunpack.c.l.b16 %v3023
    %v3227 = vunpack.c.l.b16 %v3024
    %v3228 = vunpack.c.l.b16 %v3025
    %v3229 = vunpack.c.l.b16 %v3026
    %v3230 = vunpack.c.l.b16 %v3027
    %v3231 = vunpack.c.l.b16 %v3028
    %v3232 = vunpack.c.l.b16 %v3029
    %v3233 = vunpack.c.l.b16 %v3030
    %v3234 = vunpack.c.l.b16 %v3031
    %v3235 = vunpack.c.l.b16 %v3032
    %v3236 = vunpack.c.l.b16 %v3033
    %v3237 = vunpack.c.l.b16 %v3034
    %v3238 = vunpack.c.l.b16 %v3035
    %v3239 = vunpack.c.l.b16 %v3036
    %v3240 = vunpack.c.l.b16 %v3037
    %v3241 = vunpack.c.l.b16 %v3038
    %v3242 = vunpack.c.l.b16 %v3039
    %v3243 = vunpack.c.l.b16 %v3040
    %v3244 = vunpack.c.l.b16 %v3041
    %v3245 = vunpack.c.l.b16 %v3042
    %v3246 = vunpack.c.l.b16 %v3043
    %v3247 = vunpack.c.l.b16 %v3044
    %v3248 = vunpack.c.l.b16 %v3045
    %v3249 = vunpack.c.l.b16 %v3046
    %v3250 = vunpack.c.l.b16 %v3047
    %v3251 = vunpack.c.l.b16 %v3048
    %v3252 = vunpack.c.l.b16 %v3049
    %v3253 = vunpack.c.l.b16 %v3050
    %v3254 = vunpack.c.l.b16 %v3051
    %v3255 = vunpack.c.l.b16 %v3052
    %v3256 = vunpack.c.l.b16 %v3053
    %v3257 = vunpack.c.l.b16 %v3054
    %v3258 = vunpack.c.l.b16 %v3055
    %v3259 = vunpack.c.l.b16 %v3056
    %v3260 = vunpack.c.l.b16 %v3057
    %v3261 = vunpack.c.l.b16 %v3058
    %v3262 = vunpack.c.l.b16 %v3059
    %v3263 = vunpack.c.l.b16 %v3060
    %v3264 = vunpack.c.l.b16 %v3061
    %v3265 = vpack.c.b16 %v3168, %v3167
    %v3266 = vpack.c.b16 %v3170, %v3169
    %v3267 = vpack.c.b16 %v3172, %v3171
    %v3268 = vpack.c.b16 %v3174, %v3173
    %v3269 = vpack.c.b16 %v3176, %v3175
    %v3270 = vpack.c.b16 %v3178, %v3177
    %v3271 = vpack.c.b16 %v3180, %v3179
    %v3272 = vpack.c.b16 %v3182, %v3181
    %v3273 = vpack.c.b16 %v3184, %v3183
    %v3274 = vpack.c.b16 %v3186, %v3185
    %v3275 = vpack.c.b16 %v3188, %v3187
    %v3276 = vpack.c.b16 %v3190, %v3189
    %v3277 = vpack.c.b16 %v3192, %v3191
    %v3278 = vpack.c.b16 %v3194, %v3193
    %v3279 = vpack.c.b16 %v3196, %v3195
    %v3280 = vpack.c.b16 %v3198, %v3197
    %v3281 = vpack.c.b16 %v3200, %v3199
    %v3282 = vpack.c.b16 %v3202, %v3201
    %v3283 = vpack.c.b16 %v3204, %v3203
    %v3284 = vpack.c.b16 %v3206, %v3205
    %v3285 = vpack.c.b16 %v3208, %v3207
    %v3286 = vpack.c.b16 %v3210, %v3209
    %v3287 = vpack.c.b16 %v3212, %v3211
    %v3288 = vpack.c.b16 %v3214, %v3213
    %v3289 = vpack.c.b16 %v3216, %v3215
    %v3290 = vpack.c.b16 %v3218, %v3217
    %v3291 = vpack.c.b16 %v3220, %v3219
    %v3292 = vpack.c.b16 %v3222, %v3221
    %v3293 = vpack.c.b16 %v3224, %v3223
    %v3294 = vpack.c.b16 %v3226, %v3225
    %v3295 = vpack.c.b16 %v3228, %v3227
    %v3296 = vpack.c.b16 %v3230, %v3229
    %v3297 = vpack.c.b16 %v3232, %v3231
    %v3298 = vpack.c.b16 %v3234, %v3233
    %v3299 = vpack.c.b16 %v3236, %v3235
    %v3300 = vpack.c.b16 %v3238, %v3237
    %v3301 = vpack.c.b16 %v3240, %v3239
    %v3302 = vpack.c.b16 %v3242, %v3241
    %v3303 = vpack.c.b16 %v3244, %v3243
    %v3304 = vpack.c.b16 %v3246, %v3245
    %v3305 = vpack.c.b16 %v3248, %v3247
    %v3306 = vpack.c.b16 %v3250, %v3249
    %v3307 = vpack.c.b16 %v3252, %v3251
    %v3308 = vpack.c.b16 %v3254, %v3253
    %v3309 = vpack.c.b16 %v3256, %v3255
    %v3310 = vpack.c.b16 %v3258, %v3257
    %v3311 = vpack.c.b16 %v3260, %v3259
    %v3312 = vpack.c.b16 %v3262, %v3261
    %v3313 = vpack.c.b16 %v3264, %v3263
    %v3364 = vsel %vm2294, %v2963, 0
    %3366 = vmatprep.subr.bf16.mxu0 0
    %3367 = vmatpush1.bf16.msra.mxu0 %v3272
    %3368 = vmatprep.subr.bf16.mxu0 0
    %3369 = vmatpush1.bf16.msra.mxu0 %v3271
    %3370 = vmatprep.subr.bf16.mxu0 0
    %3371 = vmatpush1.bf16.msra.mxu0 %v3270
    %3372 = vmatprep.subr.bf16.mxu0 0
    %3373 = vmatpush1.bf16.msra.mxu0 %v3269
    %3374 = vmatprep.subr.bf16.mxu0 0
    %3375 = vmatpush1.bf16.msra.mxu0 %v3268
    %3376 = vmatprep.subr.bf16.mxu0 0
    %3377 = vmatpush1.bf16.msra.mxu0 %v3267
    %3378 = vmatprep.subr.bf16.mxu0 0
    %3379 = vmatpush1.bf16.msra.mxu0 %v3266
    %3380 = vmatprep.subr.bf16.mxu0 0
    %3381 = vmatpush1.bf16.msra.mxu0 %v3265
    %3382 = vmatprep.subr.bf16.mxu0 0
    %3383 = vmatpush2.bf16.msra.mxu0 %v3280
    %3384 = vmatprep.subr.bf16.mxu0 0
    %3385 = vmatpush2.bf16.msra.mxu0 %v3279
    %3386 = vmatprep.subr.bf16.mxu0 0
    %3387 = vmatpush2.bf16.msra.mxu0 %v3278
    %3388 = vmatprep.subr.bf16.mxu0 0
    %3389 = vmatpush2.bf16.msra.mxu0 %v3277
    %3390 = vmatprep.subr.bf16.mxu0 0
    %3391 = vmatpush2.bf16.msra.mxu0 %v3276
    %3392 = vmatprep.subr.bf16.mxu0 0
    %3393 = vmatpush2.bf16.msra.mxu0 %v3275
    %3394 = vmatprep.subr.bf16.mxu0 0
    %3395 = vmatpush2.bf16.msra.mxu0 %v3274
    %3396 = vmatprep.subr.bf16.mxu0 0
    %3397 = vmatpush2.bf16.msra.mxu0 %v3273
    %3398 = vmatprep.mubr.bf16.mxu0 %v2958
    %3399 = vmatmul.mubr.bf16.gmra.mxu0 %v2957
    %v3400 = vpop.f32.mrf.mxu0
    %v3401 = vadd.f32 %v3067, %v3400
    %v3402 = vpop.f32.mrf.mxu0
    %v3403 = vpop.f32.mrf.mxu0
    %v3404 = vpop.f32.mrf.mxu0
    %3405 = vdwg.mxu0
    %3406 = vmatprep.subr.bf16.mxu0 0
    %3407 = vmatpush1.bf16.msra.mxu0 %v3288
    %3408 = vmatprep.subr.bf16.mxu0 0
    %3409 = vmatpush1.bf16.msra.mxu0 %v3287
    %3410 = vmatprep.subr.bf16.mxu0 0
    %3411 = vmatpush1.bf16.msra.mxu0 %v3286
    %3412 = vmatprep.subr.bf16.mxu0 0
    %3413 = vmatpush1.bf16.msra.mxu0 %v3285
    %3414 = vmatprep.subr.bf16.mxu0 0
    %3415 = vmatpush1.bf16.msra.mxu0 %v3284
    %3416 = vmatprep.subr.bf16.mxu0 0
    %3417 = vmatpush1.bf16.msra.mxu0 %v3283
    %3418 = vmatprep.subr.bf16.mxu0 0
    %3419 = vmatpush1.bf16.msra.mxu0 %v3282
    %3420 = vmatprep.subr.bf16.mxu0 0
    %3421 = vmatpush1.bf16.msra.mxu0 %v3281
    %3422 = vmatprep.subr.bf16.mxu0 0
    %3423 = vmatpush2.bf16.msra.mxu0 %v3296
    %3424 = vmatprep.subr.bf16.mxu0 0
    %3425 = vmatpush2.bf16.msra.mxu0 %v3295
    %3426 = vmatprep.subr.bf16.mxu0 0
    %3427 = vmatpush2.bf16.msra.mxu0 %v3294
    %3428 = vmatprep.subr.bf16.mxu0 0
    %3429 = vmatpush2.bf16.msra.mxu0 %v3293
    %3430 = vmatprep.subr.bf16.mxu0 0
    %3431 = vmatpush2.bf16.msra.mxu0 %v3292
    %3432 = vmatprep.subr.bf16.mxu0 0
    %3433 = vmatpush2.bf16.msra.mxu0 %v3291
    %3434 = vmatprep.subr.bf16.mxu0 0
    %3435 = vmatpush2.bf16.msra.mxu0 %v3290
    %3436 = vmatprep.subr.bf16.mxu0 0
    %3437 = vmatpush2.bf16.msra.mxu0 %v3289
    %3438 = vmatprep.mubr.bf16.mxu0 %v2960
    %3439 = vmatmul.mubr.bf16.gmra.mxu0 %v2959
    %v3440 = vpop.f32.mrf.mxu0
    %v3441 = vadd.f32 %v3401, %v3440
    %v3442 = vpop.f32.mrf.mxu0
    %v3443 = vpop.f32.mrf.mxu0
    %v3444 = vpop.f32.mrf.mxu0
    %3445 = vdwg.mxu0
    %3446 = vmatprep.subr.bf16.mxu0 0
    %3447 = vmatpush1.bf16.msra.mxu0 %v3304
    %3448 = vmatprep.subr.bf16.mxu0 0
    %3449 = vmatpush1.bf16.msra.mxu0 %v3303
    %3450 = vmatprep.subr.bf16.mxu0 0
    %3451 = vmatpush1.bf16.msra.mxu0 %v3302
    %3452 = vmatprep.subr.bf16.mxu0 0
    %3453 = vmatpush1.bf16.msra.mxu0 %v3301
    %3454 = vmatprep.subr.bf16.mxu0 0
    %3455 = vmatpush1.bf16.msra.mxu0 %v3300
    %3456 = vmatprep.subr.bf16.mxu0 0
    %3457 = vmatpush1.bf16.msra.mxu0 %v3299
    %3458 = vmatprep.subr.bf16.mxu0 0
    %3459 = vmatpush1.bf16.msra.mxu0 %v3298
    %3460 = vmatprep.subr.bf16.mxu0 0
    %3461 = vmatpush1.bf16.msra.mxu0 %v3297
    %3462 = vmatprep.subr.bf16.mxu0 0
    %3463 = vmatpush2.bf16.msra.mxu0 %v3312
    %3464 = vmatprep.subr.bf16.mxu0 0
    %3465 = vmatpush2.bf16.msra.mxu0 %v3311
    %3466 = vmatprep.subr.bf16.mxu0 0
    %3467 = vmatpush2.bf16.msra.mxu0 %v3310
    %3468 = vmatprep.subr.bf16.mxu0 0
    %3469 = vmatpush2.bf16.msra.mxu0 %v3309
    %3470 = vmatprep.subr.bf16.mxu0 0
    %3471 = vmatpush2.bf16.msra.mxu0 %v3308
    %3472 = vmatprep.subr.bf16.mxu0 0
    %3473 = vmatpush2.bf16.msra.mxu0 %v3307
    %3474 = vmatprep.subr.bf16.mxu0 0
    %3475 = vmatpush2.bf16.msra.mxu0 %v3306
    %3476 = vmatprep.subr.bf16.mxu0 0
    %3477 = vmatpush2.bf16.msra.mxu0 %v3305
    %3478 = vmatprep.mubr.bf16.mxu0 %v2962
    %3479 = vmatmul.mubr.bf16.gmra.mxu0 %v2961
    %v3480 = vpop.f32.mrf.mxu0
    %v3481 = vadd.f32 %v3441, %v3480
    %v3482 = vpop.f32.mrf.mxu0
    %v3483 = vpop.f32.mrf.mxu0
    %v3484 = vpop.f32.mrf.mxu0
    %3485 = vdwg.mxu0
    %3486 = vmatprep.subr.bf16.mxu0 0
    %3487 = vmatpush1.bf16.msra.mxu0 0
    %3488 = vmatprep.subr.bf16.mxu0 0
    %3489 = vmatpush1.bf16.msra.mxu0 0
    %3490 = vmatprep.subr.bf16.mxu0 0
    %3491 = vmatpush1.bf16.msra.mxu0 0
    %3492 = vmatprep.subr.bf16.mxu0 0
    %3493 = vmatpush1.bf16.msra.mxu0 0
    %3494 = vmatprep.subr.bf16.mxu0 0
    %3495 = vmatpush1.bf16.msra.mxu0 0
    %3496 = vmatprep.subr.bf16.mxu0 0
    %3497 = vmatpush1.bf16.msra.mxu0 0
    %3498 = vmatprep.subr.bf16.mxu0 0
    %3499 = vmatpush1.bf16.msra.mxu0 0
    %3500 = vmatprep.subr.bf16.mxu0 0
    %3501 = vmatpush1.bf16.msra.mxu0 %v3313
    %3502 = vmatprep.subr.bf16.mxu0 0
    %3503 = vmatpush2.bf16.msra.mxu0 0
    %3504 = vmatprep.subr.bf16.mxu0 0
    %3505 = vmatpush2.bf16.msra.mxu0 0
    %3506 = vmatprep.subr.bf16.mxu0 0
    %3507 = vmatpush2.bf16.msra.mxu0 0
    %3508 = vmatprep.subr.bf16.mxu0 0
    %3509 = vmatpush2.bf16.msra.mxu0 0
    %3510 = vmatprep.subr.bf16.mxu0 0
    %3511 = vmatpush2.bf16.msra.mxu0 0
    %3512 = vmatprep.subr.bf16.mxu0 0
    %3513 = vmatpush2.bf16.msra.mxu0 0
    %3514 = vmatprep.subr.bf16.mxu0 0
    %3515 = vmatpush2.bf16.msra.mxu0 0
    %3516 = vmatprep.subr.bf16.mxu0 0
    %3517 = vmatpush2.bf16.msra.mxu0 0
    %3518 = vmatprep.mubr.bf16.mxu0 0
    %3519 = vmatmul.mubr.bf16.gmra.mxu0 %v3364
    %v3520 = vpop.f32.mrf.mxu0
    %v3521 = vadd.f32 %v3481, %v3520
    %v3522 = vpop.f32.mrf.mxu0
    %v3523 = vpop.f32.mrf.mxu0
    %v3524 = vpop.f32.mrf.mxu0
    %3525 = vdwg.mxu0
    %v3526 = vmax.f32 %v3521, 0.0
    %3527 = vst [vmem:[#allocation11] sm:$0xff] %v3526
    %v3528 = vlaneseq
    %v3529 = vand.u32 %v3528, 127
    %vm3530 = vcmp.lt.s32.totalorder %v3529, 10
    %v3531 = vsel %vm3530, %v3526, -inf
    %3532 = vmax.xlane.f32.xlu0 %v3531
    %v3533 = vpop.xlane.xlu0 %3532
    %v3534 = vsub.f32 %v3531, %v3533
    %v3535 = vmul.f32 %v3534, 1.442695
    %v3536 = vpow.pop %v3535
    %3537 = vadd.xlane.f32.xlu0 %v3536
    %v3538 = vpop.xlane.xlu0 %3537
    %v3539 = vrcp.pop %v3538
    %v3540 = vmul.f32 %v3536, %v3539
    %3541 = vst [vmem:[#allocation12] sm:$0xff] %v3540
    // Predicated region
    $region42: #{tpu_custom_call.1} parent=1 // pred_check
      _
    $region43: #{tpu_custom_call.1} parent=1 // pred_check_branch
      %3543 = sbr.rel (0) target = $region45
    $region44: #{tpu_custom_call.1} parent=1 // pred_region
      %s3545 = ssub.s32 128, 128
      %3546 = vsyncadd [#allocation4], %s3545
      %s3548 = sshll.u32 [#allocation11], 4
      %s3549 = int_to_ptr.vmem [resolvable:$true] %s3548
      %3551 = dma.vmem_to_hbm [thread:$0]  %s3549, 128, %s5, [#allocation4]
    $region45: #{tpu_custom_call.1} parent=1 // pred_fallthru
      _
    // Predicated region
    $region46: #{tpu_custom_call.1} parent=1 // pred_check
      _
    $region47: #{tpu_custom_call.1} parent=1 // pred_check_branch
      %3553 = sbr.rel (0) target = $region49
    $region48: #{tpu_custom_call.1} parent=1 // pred_region
      %s3555 = ssub.s32 128, 128
      %3556 = vsyncadd [#allocation13], %s3555
      %s3558 = sshll.u32 [#allocation12], 4
      %s3559 = int_to_ptr.vmem [resolvable:$true] %s3558
      %3561 = dma.vmem_to_hbm [thread:$0]  %s3559, 128, %s6, [#allocation13]
    $region49: #{tpu_custom_call.1} parent=1 // pred_fallthru
      _
    // Predicated region
    $region50: #{tpu_custom_call.1} parent=1 // pred_check
      _
    $region51: #{tpu_custom_call.1} parent=1 // pred_check_branch
      %3563 = sbr.rel (0) target = $region53
    $region52: #{tpu_custom_call.1} parent=1 // pred_region
      %3564 = dma.done [#allocation4], 128
    $region53: #{tpu_custom_call.1} parent=1 // pred_fallthru
      _
    // Predicated region
    $region54: #{tpu_custom_call.1} parent=1 // pred_check
      _
    $region55: #{tpu_custom_call.1} parent=1 // pred_check_branch
      %3566 = sbr.rel (0) target = $region57
    $region56: #{tpu_custom_call.1} parent=1 // pred_region
      %3567 = dma.done [#allocation13], 128
    $region57: #{tpu_custom_call.1} parent=1 // pred_fallthru
      _
    %3568 = vsyncpa [#allocation3], 1
    %3569 = vsyncpa [#allocation6], 1
    %3570 = vsyncpa [#allocation9], 1
    %3571 = vsyncpa [#allocation4], 1
    %3572 = vsyncpa [#allocation13], 1

</llo_original>
